<compile_context>
chip_gen: v5e
topology: v5e:2x2
jax: 0.10.0
libtpu: 0.0.40
codegen_flags: <defaults>
</compile_context>

<pallas_src>
import jax
import jax.numpy as jnp
from jax.experimental import pallas as pl
from jax.experimental.pallas import tpu as pltpu


def _round_up(x, m):
    return (x + m - 1) // m * m


def basic_conv2d(x_nchw, weight, gamma, beta, running_mean, running_var,
                 *, stride=1, padding=0, eps=1e-3,
                 tile_rows=2048, vmem_limit_bytes=48 * 1024 * 1024):
    """Forward pass of BasicConv2d. x_nchw: [N, C, H, W], weight: [OC, C, KH, KW].

    tile_rows: target number of dense output rows per grid step (multiple-of-8 rounded).
               ~2048 fits comfortably in v7x's 64 MiB VMEM; on v5e/v6e (128 MiB) it can be
               raised together with vmem_limit_bytes (e.g. 4096-8192 rows, ~100 MiB).
    """
    oc, c_in, kh, kw = weight.shape
    n, c, h, w = x_nchw.shape
    assert c == c_in, (c, c_in)
    s = int(stride)

    hp, wp = h + 2 * padding, w + 2 * padding
    assert hp >= kh and wp >= kw, "kernel larger than padded input"
    wp8 = _round_up(wp, 8)            # sublane-aligned row pitch -> ki*wp8 tap offsets aligned
    ohd = hp - kh + 1                 # dense (stride-1) output height
    oh = (hp - kh) // s + 1           # strided output size (PyTorch semantics)
    ow = (wp - kw) // s + 1

    cp = _round_up(c, 128)            # lane-dense contraction (also gives 256-wide K for C>128)
    taps = kh * kw

    # ---- Fold BatchNorm (eval) into per-channel scale/bias; fold scale into the weights.
    inv_std = 1.0 / jnp.sqrt(running_var.astype(jnp.float32) + eps)
    scale = gamma.astype(jnp.float32) * inv_std                              # (OC,)
    bias = beta.astype(jnp.float32) - running_mean.astype(jnp.float32) * scale

    # weight [OC, C, KH, KW] -> [KH, KW, C, OC] * scale -> [taps, Cp, OC] (bf16, OC unpadded)
    w_t = jnp.transpose(weight.astype(jnp.float32), (2, 3, 1, 0)) * scale[None, None, None, :]
    w_t = w_t.reshape(taps, c, oc)
    w_t = jnp.pad(w_t, ((0, 0), (0, cp - c), (0, 0))).astype(jnp.bfloat16)
    bias_p = bias.reshape(1, oc).astype(jnp.float32)

    # ---- Activation: NCHW -> NHWC, spatial pad (+ right pad to wp8), channel pad to Cp, bf16,
    #      flatten spatial to rows.
    x = jnp.transpose(x_nchw, (0, 2, 3, 1)).astype(jnp.bfloat16)             # (N, H, W, C)
    x = jnp.pad(x, ((0, 0), (padding, padding),
                    (padding, padding + (wp8 - wp)), (0, cp - c)))
    x = x.reshape(n, hp * wp8, cp)

    # ---- Spatial tiling with halo.
    m_dense = ohd * wp8                               # dense output rows per image
    halo = (kh - 1) * wp8 + (kw - 1)                  # extra input rows a tile needs
    halo_blk = _round_up(max(halo, 1), 8)
    tile_m = _round_up(min(int(tile_rows), m_dense), halo_blk)   # halo_blk | tile_m
    num_tiles = -(-m_dense // tile_m)
    m_pad = num_tiles * tile_m
    rows = m_pad + halo_blk
    x = jnp.pad(x, ((0, 0), (0, rows - hp * wp8), (0, 0)))
    tile_in = tile_m + halo_blk
    halo_ratio = tile_m // halo_blk

    def kernel(xa_ref, xh_ref, w_ref, b_ref, o_ref, xwin_ref):
        # xa_ref:  (1, tile_m, cp)    bf16  main input rows of this tile
        # xh_ref:  (1, halo_blk, cp)  bf16  halo rows (start of next tile's region)
        # w_ref:   (taps, cp, oc)     bf16  per-tap weights (BN scale folded in), resident
        # b_ref:   (1, oc)            f32   folded BN bias, resident
        # o_ref:   (1, tile_m, oc)    bf16  output tile
        # xwin_ref:(tile_in, cp)      bf16  contiguous window scratch
        xwin_ref[0:tile_m, :] = xa_ref[0]
        xwin_ref[tile_m:tile_in, :] = xh_ref[0]
        acc = None
        for t in range(taps):
            ki, kj = divmod(t, kw)
            off = ki * wp8 + kj                      # static; ki*wp8 is 8-aligned
            contrib = jnp.dot(xwin_ref[off:off + tile_m, :], w_ref[t],
                              preferred_element_type=jnp.float32)
            acc = contrib if acc is None else acc + contrib
        y = acc + b_ref[...]                         # f32 epilogue (bias + ReLU)
        o_ref[0] = jnp.maximum(y, 0.0).astype(o_ref.dtype)

    cost = pl.CostEstimate(
        flops=2 * n * num_tiles * tile_m * cp * oc * taps,
        transcendentals=0,
        bytes_accessed=(n * num_tiles * tile_in * cp * 2      # activations (+ small halo refetch)
                        + taps * cp * oc * 2                  # resident weights
                        + n * m_pad * oc * 2))                # bf16 output writeback

    out = pl.pallas_call(
        kernel,
        out_shape=jax.ShapeDtypeStruct((n, m_pad, oc), jnp.bfloat16),
        grid_spec=pltpu.PrefetchScalarGridSpec(
            num_scalar_prefetch=0,
            grid=(n, num_tiles),
            in_specs=[
                pl.BlockSpec((1, tile_m, cp), lambda i, j: (i, j, 0)),
                pl.BlockSpec((1, halo_blk, cp),
                             lambda i, j: (i, (j + 1) * halo_ratio, 0)),
                pl.BlockSpec((taps, cp, oc), lambda i, j: (0, 0, 0)),
                pl.BlockSpec((1, oc), lambda i, j: (0, 0)),
            ],
            out_specs=pl.BlockSpec((1, tile_m, oc), lambda i, j: (i, j, 0)),
            scratch_shapes=[pltpu.VMEM((tile_in, cp), jnp.bfloat16)],
        ),
        compiler_params=pltpu.CompilerParams(
            dimension_semantics=("parallel", "parallel"),
            vmem_limit_bytes=int(vmem_limit_bytes),
        ),
        cost_estimate=cost,
    )(x, x, w_t, bias_p)

    # Dense rows -> (N, OHd, Wp8, OC); subsample stride, crop garbage columns, back to NCHW f32.
    out = out[:, :m_dense, :].reshape(n, ohd, wp8, oc)
    out = out[:, 0:(oh - 1) * s + 1:s, 0:(ow - 1) * s + 1:s, :]
    return jnp.transpose(out, (0, 3, 1, 2)).astype(jnp.float32)


# ---------------- references for validation ----------------

def _reference_f32(x, weight, gamma, beta, mean, var, *, stride, padding, eps=1e-3):
    y = jax.lax.conv_general_dilated(
        x, weight, (stride, stride), [(padding, padding), (padding, padding)],
        dimension_numbers=("NCHW", "OIHW", "NCHW"))
    inv = 1.0 / jnp.sqrt(var + eps)
    sc = (gamma * inv).reshape(1, -1, 1, 1)
    b = (beta - mean * gamma * inv).reshape(1, -1, 1, 1)
    return jnp.maximum(y * sc + b, 0.0)


def _reference_bf16_quantized(x, weight, gamma, beta, mean, var, *, stride, padding, eps=1e-3):
    """Same operand quantization as the kernel (bf16 activations / scale-folded bf16 weights,
    f32 accumulation); the kernel additionally rounds its output to bf16."""
    inv = 1.0 / jnp.sqrt(var.astype(jnp.float32) + eps)
    sc = gamma.astype(jnp.float32) * inv
    b = (beta.astype(jnp.float32) - mean.astype(jnp.float32) * sc).reshape(1, -1, 1, 1)
    w_s = (weight.astype(jnp.float32) * sc[:, None, None, None]).astype(jnp.bfloat16)
    xb = x.astype(jnp.bfloat16)
    y = jax.lax.conv_general_dilated(
        xb, w_s, (stride, stride), [(padding, padding), (padding, padding)],
        dimension_numbers=("NCHW", "OIHW", "NCHW"),
        preferred_element_type=jnp.float32)
    return jnp.maximum(y + b, 0.0)


if __name__ == "__main__":
    key = jax.random.PRNGKey(0)
    k_x, k_w, k_g, k_b, k_m, k_v = jax.random.split(key, 6)

    # BasicConv2d(in_planes=4, out_planes=8, kernel_size=3, stride=1, padding=1)
    N, C, H, W = 2, 4, 16, 16
    OC, KH, KW = 8, 3, 3
    STRIDE, PAD = 1, 1

    x = jax.random.normal(k_x, (N, C, H, W), dtype=jnp.float32)
    weight = jax.random.normal(k_w, (OC, C, KH, KW), dtype=jnp.float32) * 0.1
    gamma = 1.0 + 0.1 * jax.random.normal(k_g, (OC,), dtype=jnp.float32)
    beta = 0.1 * jax.random.normal(k_b, (OC,), dtype=jnp.float32)
    running_mean = 0.1 * jax.random.normal(k_m, (OC,), dtype=jnp.float32)
    running_var = jnp.abs(1.0 + 0.1 * jax.random.normal(k_v, (OC,), dtype=jnp.float32))

    conv_fn = jax.jit(
        basic_conv2d,
        static_argnames=("stride", "padding", "eps", "tile_rows", "vmem_limit_bytes"))

    # Multi-tile path: tile_rows=128 -> several spatial tiles + halo fetch even at 16x16.
    out = jax.block_until_ready(
        conv_fn(x, weight, gamma, beta, running_mean, running_var,
                stride=STRIDE, padding=PAD, tile_rows=128))
    assert out.shape == (N, OC, H, W), out.shape

    # Default (single-tile) path must agree with the multi-tile path.
    out_1tile = jax.block_until_ready(
        conv_fn(x, weight, gamma, beta, running_mean, running_var,
                stride=STRIDE, padding=PAD))
    assert jnp.allclose(out, out_1tile, rtol=0.0, atol=1e-6), \
        "tiled vs single-tile mismatch"

    ref_q = _reference_bf16_quantized(x, weight, gamma, beta, running_mean, running_var,
                                      stride=STRIDE, padding=PAD)
    assert jnp.allclose(out, ref_q, rtol=1e-2, atol=1e-2), \
        "mismatch vs bf16-quantized conv+bn+relu reference"

    ref_f = _reference_f32(x, weight, gamma, beta, running_mean, running_var,
                           stride=STRIDE, padding=PAD)
    assert jnp.allclose(out, ref_f, rtol=5e-2, atol=5e-2), \
        "mismatch vs f32 conv+bn+relu reference"

    print("KERNEL_OK")
</pallas_src>

<mosaic_0001>
module attributes {stable_mosaic.version = 11 : i64} {
  func.func @kernel(%arg0: i32, %arg1: i32, %arg2: memref<1x168x128xbf16, #tpu.memory_space<vmem>>, %arg3: memref<1x56x128xbf16, #tpu.memory_space<vmem>>, %arg4: memref<9x128x8xbf16, #tpu.memory_space<vmem>>, %arg5: memref<1x8xf32, #tpu.memory_space<vmem>>, %arg6: memref<1x168x8xbf16, #tpu.memory_space<vmem>>, %arg7: memref<224x128xbf16, #tpu.memory_space<vmem>>) attributes {dimension_semantics = [#tpu.dimension_semantics<parallel>, #tpu.dimension_semantics<parallel>], iteration_bounds = array<i64: 2, 3>, scalar_prefetch = 0 : i64, scratch_operands = 1 : i64, tpu.core_type = #tpu.core_type<tc>, window_params = [{transform_indices = @transform_0, window_bounds = array<i64: 1, 168, 128>}, {transform_indices = @transform_1, window_bounds = array<i64: 1, 56, 128>}, {pipeline_mode = #tpu.pipeline_mode<synchronous>, transform_indices = @transform_2, window_bounds = array<i64: 9, 128, 8>}, {pipeline_mode = #tpu.pipeline_mode<synchronous>, transform_indices = @transform_3, window_bounds = array<i64: 1, 8>}, {transform_indices = @transform_4, window_bounds = array<i64: 1, 168, 8>}]} {
    %c0 = arith.constant 0 : index
    %c0_0 = arith.constant 0 : index
    %c0_1 = arith.constant 0 : index
    %0 = vector.load %arg2[%c0, %c0_0, %c0_1] : memref<1x168x128xbf16, #tpu.memory_space<vmem>>, vector<1x168x128xbf16>
    %1 = vector.shape_cast %0 : vector<1x168x128xbf16> to vector<168x128xbf16>
    %c0_2 = arith.constant 0 : index
    %c0_3 = arith.constant 0 : index
    %2 = vector.load %arg7[%c0_2, %c0_3] : memref<224x128xbf16, #tpu.memory_space<vmem>>, vector<168x128xbf16>
    tpu.vector_store %arg7[%c0_2, %c0_3], %1 {strides = array<i32>} : memref<224x128xbf16, #tpu.memory_space<vmem>>, vector<168x128xbf16>,
    %c0_4 = arith.constant 0 : index
    %c0_5 = arith.constant 0 : index
    %c0_6 = arith.constant 0 : index
    %3 = vector.load %arg3[%c0_4, %c0_5, %c0_6] : memref<1x56x128xbf16, #tpu.memory_space<vmem>>, vector<1x56x128xbf16>
    %4 = vector.shape_cast %3 : vector<1x56x128xbf16> to vector<56x128xbf16>
    %c168 = arith.constant 168 : index
    %c0_7 = arith.constant 0 : index
    %5 = vector.load %arg7[%c168, %c0_7] : memref<224x128xbf16, #tpu.memory_space<vmem>>, vector<56x128xbf16>
    tpu.vector_store %arg7[%c168, %c0_7], %4 {strides = array<i32>} : memref<224x128xbf16, #tpu.memory_space<vmem>>, vector<56x128xbf16>,
    %c0_8 = arith.constant 0 : index
    %c0_9 = arith.constant 0 : index
    %6 = vector.load %arg7[%c0_8, %c0_9] : memref<224x128xbf16, #tpu.memory_space<vmem>>, vector<168x128xbf16>
    %c0_10 = arith.constant 0 : index
    %c0_11 = arith.constant 0 : index
    %c0_12 = arith.constant 0 : index
    %7 = vector.load %arg4[%c0_10, %c0_11, %c0_12] : memref<9x128x8xbf16, #tpu.memory_space<vmem>>, vector<1x128x8xbf16>
    %8 = vector.shape_cast %7 : vector<1x128x8xbf16> to vector<128x8xbf16>
    %cst = arith.constant dense<0.000000e+00> : vector<168x8xf32>
    %9 = tpu.matmul %6, %8, %cst {dimension_numbers = #tpu.dot_dimension_numbers<[1], [0], [0], [1], [0, 0, 1, 1], [], []>} : vector<168x128xbf16>, vector<128x8xbf16>, vector<168x8xf32> -> vector<168x8xf32>
    %c1 = arith.constant 1 : index
    %c0_13 = arith.constant 0 : index
    %10 = vector.load %arg7[%c1, %c0_13] : memref<224x128xbf16, #tpu.memory_space<vmem>>, vector<168x128xbf16>
    %c1_14 = arith.constant 1 : index
    %c0_15 = arith.constant 0 : index
    %c0_16 = arith.constant 0 : index
    %11 = vector.load %arg4[%c1_14, %c0_15, %c0_16] : memref<9x128x8xbf16, #tpu.memory_space<vmem>>, vector<1x128x8xbf16>
    %12 = vector.shape_cast %11 : vector<1x128x8xbf16> to vector<128x8xbf16>
    %cst_17 = arith.constant dense<0.000000e+00> : vector<168x8xf32>
    %13 = tpu.matmul %10, %12, %cst_17 {dimension_numbers = #tpu.dot_dimension_numbers<[1], [0], [0], [1], [0, 0, 1, 1], [], []>} : vector<168x128xbf16>, vector<128x8xbf16>, vector<168x8xf32> -> vector<168x8xf32>
    %14 = arith.addf %9, %13 : vector<168x8xf32>
    %c2 = arith.constant 2 : index
    %c0_18 = arith.constant 0 : index
    %15 = vector.load %arg7[%c2, %c0_18] : memref<224x128xbf16, #tpu.memory_space<vmem>>, vector<168x128xbf16>
    %c2_19 = arith.constant 2 : index
    %c0_20 = arith.constant 0 : index
    %c0_21 = arith.constant 0 : index
    %16 = vector.load %arg4[%c2_19, %c0_20, %c0_21] : memref<9x128x8xbf16, #tpu.memory_space<vmem>>, vector<1x128x8xbf16>
    %17 = vector.shape_cast %16 : vector<1x128x8xbf16> to vector<128x8xbf16>
    %cst_22 = arith.constant dense<0.000000e+00> : vector<168x8xf32>
    %18 = tpu.matmul %15, %17, %cst_22 {dimension_numbers = #tpu.dot_dimension_numbers<[1], [0], [0], [1], [0, 0, 1, 1], [], []>} : vector<168x128xbf16>, vector<128x8xbf16>, vector<168x8xf32> -> vector<168x8xf32>
    %19 = arith.addf %14, %18 : vector<168x8xf32>
    %c24 = arith.constant 24 : index
    %c0_23 = arith.constant 0 : index
    %20 = vector.load %arg7[%c24, %c0_23] : memref<224x128xbf16, #tpu.memory_space<vmem>>, vector<168x128xbf16>
    %c3 = arith.constant 3 : index
    %c0_24 = arith.constant 0 : index
    %c0_25 = arith.constant 0 : index
    %21 = vector.load %arg4[%c3, %c0_24, %c0_25] : memref<9x128x8xbf16, #tpu.memory_space<vmem>>, vector<1x128x8xbf16>
    %22 = vector.shape_cast %21 : vector<1x128x8xbf16> to vector<128x8xbf16>
    %cst_26 = arith.constant dense<0.000000e+00> : vector<168x8xf32>
    %23 = tpu.matmul %20, %22, %cst_26 {dimension_numbers = #tpu.dot_dimension_numbers<[1], [0], [0], [1], [0, 0, 1, 1], [], []>} : vector<168x128xbf16>, vector<128x8xbf16>, vector<168x8xf32> -> vector<168x8xf32>
    %24 = arith.addf %19, %23 : vector<168x8xf32>
    %c25 = arith.constant 25 : index
    %c0_27 = arith.constant 0 : index
    %25 = vector.load %arg7[%c25, %c0_27] : memref<224x128xbf16, #tpu.memory_space<vmem>>, vector<168x128xbf16>
    %c4 = arith.constant 4 : index
    %c0_28 = arith.constant 0 : index
    %c0_29 = arith.constant 0 : index
    %26 = vector.load %arg4[%c4, %c0_28, %c0_29] : memref<9x128x8xbf16, #tpu.memory_space<vmem>>, vector<1x128x8xbf16>
    %27 = vector.shape_cast %26 : vector<1x128x8xbf16> to vector<128x8xbf16>
    %cst_30 = arith.constant dense<0.000000e+00> : vector<168x8xf32>
    %28 = tpu.matmul %25, %27, %cst_30 {dimension_numbers = #tpu.dot_dimension_numbers<[1], [0], [0], [1], [0, 0, 1, 1], [], []>} : vector<168x128xbf16>, vector<128x8xbf16>, vector<168x8xf32> -> vector<168x8xf32>
    %29 = arith.addf %24, %28 : vector<168x8xf32>
    %c26 = arith.constant 26 : index
    %c0_31 = arith.constant 0 : index
    %30 = vector.load %arg7[%c26, %c0_31] : memref<224x128xbf16, #tpu.memory_space<vmem>>, vector<168x128xbf16>
    %c5 = arith.constant 5 : index
    %c0_32 = arith.constant 0 : index
    %c0_33 = arith.constant 0 : index
    %31 = vector.load %arg4[%c5, %c0_32, %c0_33] : memref<9x128x8xbf16, #tpu.memory_space<vmem>>, vector<1x128x8xbf16>
    %32 = vector.shape_cast %31 : vector<1x128x8xbf16> to vector<128x8xbf16>
    %cst_34 = arith.constant dense<0.000000e+00> : vector<168x8xf32>
    %33 = tpu.matmul %30, %32, %cst_34 {dimension_numbers = #tpu.dot_dimension_numbers<[1], [0], [0], [1], [0, 0, 1, 1], [], []>} : vector<168x128xbf16>, vector<128x8xbf16>, vector<168x8xf32> -> vector<168x8xf32>
    %34 = arith.addf %29, %33 : vector<168x8xf32>
    %c48 = arith.constant 48 : index
    %c0_35 = arith.constant 0 : index
    %35 = vector.load %arg7[%c48, %c0_35] : memref<224x128xbf16, #tpu.memory_space<vmem>>, vector<168x128xbf16>
    %c6 = arith.constant 6 : index
    %c0_36 = arith.constant 0 : index
    %c0_37 = arith.constant 0 : index
    %36 = vector.load %arg4[%c6, %c0_36, %c0_37] : memref<9x128x8xbf16, #tpu.memory_space<vmem>>, vector<1x128x8xbf16>
    %37 = vector.shape_cast %36 : vector<1x128x8xbf16> to vector<128x8xbf16>
    %cst_38 = arith.constant dense<0.000000e+00> : vector<168x8xf32>
    %38 = tpu.matmul %35, %37, %cst_38 {dimension_numbers = #tpu.dot_dimension_numbers<[1], [0], [0], [1], [0, 0, 1, 1], [], []>} : vector<168x128xbf16>, vector<128x8xbf16>, vector<168x8xf32> -> vector<168x8xf32>
    %39 = arith.addf %34, %38 : vector<168x8xf32>
    %c49 = arith.constant 49 : index
    %c0_39 = arith.constant 0 : index
    %40 = vector.load %arg7[%c49, %c0_39] : memref<224x128xbf16, #tpu.memory_space<vmem>>, vector<168x128xbf16>
    %c7 = arith.constant 7 : index
    %c0_40 = arith.constant 0 : index
    %c0_41 = arith.constant 0 : index
    %41 = vector.load %arg4[%c7, %c0_40, %c0_41] : memref<9x128x8xbf16, #tpu.memory_space<vmem>>, vector<1x128x8xbf16>
    %42 = vector.shape_cast %41 : vector<1x128x8xbf16> to vector<128x8xbf16>
    %cst_42 = arith.constant dense<0.000000e+00> : vector<168x8xf32>
    %43 = tpu.matmul %40, %42, %cst_42 {dimension_numbers = #tpu.dot_dimension_numbers<[1], [0], [0], [1], [0, 0, 1, 1], [], []>} : vector<168x128xbf16>, vector<128x8xbf16>, vector<168x8xf32> -> vector<168x8xf32>
    %44 = arith.addf %39, %43 : vector<168x8xf32>
    %c50 = arith.constant 50 : index
    %c0_43 = arith.constant 0 : index
    %45 = vector.load %arg7[%c50, %c0_43] : memref<224x128xbf16, #tpu.memory_space<vmem>>, vector<168x128xbf16>
    %c8 = arith.constant 8 : index
    %c0_44 = arith.constant 0 : index
    %c0_45 = arith.constant 0 : index
    %46 = vector.load %arg4[%c8, %c0_44, %c0_45] : memref<9x128x8xbf16, #tpu.memory_space<vmem>>, vector<1x128x8xbf16>
    %47 = vector.shape_cast %46 : vector<1x128x8xbf16> to vector<128x8xbf16>
    %cst_46 = arith.constant dense<0.000000e+00> : vector<168x8xf32>
    %48 = tpu.matmul %45, %47, %cst_46 {dimension_numbers = #tpu.dot_dimension_numbers<[1], [0], [0], [1], [0, 0, 1, 1], [], []>} : vector<168x128xbf16>, vector<128x8xbf16>, vector<168x8xf32> -> vector<168x8xf32>
    %49 = arith.addf %44, %48 : vector<168x8xf32>
    %c0_47 = arith.constant 0 : index
    %c0_48 = arith.constant 0 : index
    %50 = vector.load %arg5[%c0_47, %c0_48] : memref<1x8xf32, #tpu.memory_space<vmem>>, vector<1x8xf32>
    %51 = vector.broadcast %50 : vector<1x8xf32> to vector<168x8xf32>
    %52 = arith.addf %49, %51 : vector<168x8xf32>
    %cst_49 = arith.constant 0.000000e+00 : f32
    %53 = vector.broadcast %cst_49 : f32 to vector<168x8xf32>
    %54 = arith.maximumf %52, %53 : vector<168x8xf32>
    %55 = arith.truncf %54 : vector<168x8xf32> to vector<168x8xbf16>
    %c0_50 = arith.constant 0 : index
    %c0_51 = arith.constant 0 : index
    %c0_52 = arith.constant 0 : index
    %56 = vector.load %arg6[%c0_50, %c0_51, %c0_52] : memref<1x168x8xbf16, #tpu.memory_space<vmem>>, vector<1x168x8xbf16>
    %57 = vector.shape_cast %56 : vector<1x168x8xbf16> to vector<168x8xbf16>
    %58 = vector.shape_cast %55 : vector<168x8xbf16> to vector<1x168x8xbf16>
    tpu.vector_store %arg6[%c0_50, %c0_51, %c0_52], %58 {strides = array<i32>} : memref<1x168x8xbf16, #tpu.memory_space<vmem>>, vector<1x168x8xbf16>,
    return
  }
  func.func @transform_0(%arg0: i32, %arg1: i32) -> (i32, i32, i32) {
    %c0_i32 = arith.constant 0 : i32
    %c0_i32_0 = arith.constant 0 : i32
    return %arg0, %arg1, %c0_i32 : i32, i32, i32
  }
  func.func @transform_1(%arg0: i32, %arg1: i32) -> (i32, i32, i32) {
    %c1_i32 = arith.constant 1 : i32
    %0 = arith.addi %arg1, %c1_i32 : i32
    %c3_i32 = arith.constant 3 : i32
    %1 = arith.muli %0, %c3_i32 : i32
    %c0_i32 = arith.constant 0 : i32
    %c0_i32_0 = arith.constant 0 : i32
    return %arg0, %1, %c0_i32 : i32, i32, i32
  }
  func.func @transform_2(%arg0: i32, %arg1: i32) -> (i32, i32, i32) {
    %c0_i32 = arith.constant 0 : i32
    %c0_i32_0 = arith.constant 0 : i32
    %c0_i32_1 = arith.constant 0 : i32
    %c0_i32_2 = arith.constant 0 : i32
    return %c0_i32, %c0_i32_0, %c0_i32_1 : i32, i32, i32
  }
  func.func @transform_3(%arg0: i32, %arg1: i32) -> (i32, i32) {
    %c0_i32 = arith.constant 0 : i32
    %c0_i32_0 = arith.constant 0 : i32
    %c0_i32_1 = arith.constant 0 : i32
    return %c0_i32, %c0_i32_0 : i32, i32
  }
  func.func @transform_4(%arg0: i32, %arg1: i32) -> (i32, i32, i32) {
    %c0_i32 = arith.constant 0 : i32
    %c0_i32_0 = arith.constant 0 : i32
    return %arg0, %arg1, %c0_i32 : i32, i32, i32
  }
}

</mosaic_0001>

<llo_original>
// kernel: basic_conv2d.1
$region0: #{basic_conv2d.1}
  #allocation0 [shape = 'u32[]', space=smem, size = 0x4, offset = 0x4, fixed_abs, tag = 'smem constant byte address 0x4 - core index']
  #allocation1 [shape = 'u32[72,128]{1,0:T(1,128)}', space=vmem, size = 0x9000, scoped, tag = 'internal scratch']
  #allocation2 [shape = 'bf16[224,128]{1,0:T(8,128)(2,1)}', space=vmem, size = 0xe000, scoped, tag = 'scratch operand']
  %s0 = inlined_call_operand.vmem [shape: bf16[2,560,128], index: 0, kind: input, shape index: {}, may-alias: {0,1}]
  %s1 = inlined_call_operand.vmem [shape: bf16[2,560,128], index: 1, kind: input, shape index: {}, may-alias: {0,1}]
  %s2 = inlined_call_operand.vmem [shape: bf16[9,128,8], index: 2, kind: input, shape index: {}]
  %s3 = inlined_call_operand.vmem [shape: f32[1,8], index: 3, kind: input, shape index: {}]
  %s4 = inlined_call_operand.vmem [shape: bf16[2,504,8], index: 4, kind: output, shape index: {}]
  %s5 = sld [smem:[#allocation0]]
  $region49: #{basic_conv2d.1} parent=0
    _
  %s7 = ssub.s32 1, %s5
  %s8 = scalar_select 0, %s7, %s5
  loop: start=0, step=1, limit=8
  $region2: #{basic_conv2d.1} parent=0 // loop_pre_header
    _
  $region3: #{basic_conv2d.1} parent=0 // loop_header
    %s10 = sphi 0, %s14
    %p11 = scmp.ge.s32.totalorder %s10, 8
    %s17 = sphi 0, %s29
    %s18 = sphi 0, %s25
    %s19 = sphi 0, %s17
    %s20 = sphi 0, %s18
    %s21 = sphi 0, %s19
    %s22 = sphi 0, %s20
    %s34 = sphi 0, %s36
    %s37 = sphi 0, %s34
    %s38 = sphi 0, %s37
    %s54 = sphi 0, %s38
    %s66 = sphi 0, %s68
    %s69 = sphi 0, %s66
    %s70 = sphi 0, %s69
    %s86 = sphi 0, %s70
    %s90 = sphi 0, %s90
    %s92 = sphi 0, %s90
    %s93 = sphi 0, %s92
    %s107 = sphi 0, %s93
    %s111 = sphi 0, %s111
    %s113 = sphi 0, %s111
    %s114 = sphi 0, %s113
    %s128 = sphi 0, %s114
    %s136 = sphi 0, %s138
    %s139 = sphi 0, %s136
    %s140 = sphi 0, %s139
    %s156 = sphi 0, %s140
  $region4: #{basic_conv2d.1} parent=0 // loop_header_branch
    %13 = sbr.rel (%p11) target = $region8
  $region5: #{basic_conv2d.1} parent=0 // loop_body
    %s15 = ssub.s32 %s10, 1
    %s16 = ssub.s32 %s10, 2
    %s23 = sadd.s32 1, %s18
    %p24 = scmp.ge.s32.totalorder %s23, 3
    %s25 = scalar_select %p24, 0, %s23
    %s26 = sadd.s32 1, %s17
    %s27 = scalar_select %p24, %s26, %s17
    %p28 = scmp.ge.s32.totalorder %s27, 2
    %s29 = scalar_select %p28, 0, %s27
    %s30 = ssub.s32 %s17, %s29
    %s31 = ssub.s32 %s18, %s25
    %s32 = sor.u32 %s30, %s31
    %p33 = scmp.eq.s32.totalorder %s32, 0
    %s35 = sadd.s32 %s34, 1
    %s36 = scalar_select %p33, %s34, %s35
    %p39 = pneg %p33
    %p40 = scmp.eq.s32.totalorder %s10, 5
    %p41 = por %p39, %p40
    %p42 = scmp.ne.s32.totalorder %s34, %s37
    %p43 = scmp.eq.s32.totalorder %s10, 0
    %p44 = por %p42, %p43
    %p45 = scmp.ne.s32.totalorder %s34, %s37
    %p46 = scmp.eq.s32.totalorder %s15, 5
    %p47 = por %p45, %p46
    %p48 = scmp.ne.s32.totalorder %s37, %s38
    %p49 = scmp.eq.s32.totalorder %s15, 0
    %p50 = por %p48, %p49
    %p51 = scmp.ne.s32.totalorder %s37, %s38
    %p52 = scmp.eq.s32.totalorder %s16, 5
    %p53 = por %p51, %p52
    %p55 = scmp.ne.s32.totalorder %s38, %s54
    %p56 = scmp.eq.s32.totalorder %s16, 0
    %p57 = por %p55, %p56
    %s58 = sadd.s32 %s18, 1
    %s59 = smul.u32 %s58, 3
    %s60 = sadd.s32 %s25, 1
    %s61 = smul.u32 %s60, 3
    %s62 = ssub.s32 %s17, %s29
    %s63 = ssub.s32 %s59, %s61
    %s64 = sor.u32 %s62, %s63
    %p65 = scmp.eq.s32.totalorder %s64, 0
    %s67 = sadd.s32 %s66, 1
    %s68 = scalar_select %p65, %s66, %s67
    %p71 = pneg %p65
    %p72 = scmp.eq.s32.totalorder %s10, 5
    %p73 = por %p71, %p72
    %p74 = scmp.ne.s32.totalorder %s66, %s69
    %p75 = scmp.eq.s32.totalorder %s10, 0
    %p76 = por %p74, %p75
    %p77 = scmp.ne.s32.totalorder %s66, %s69
    %p78 = scmp.eq.s32.totalorder %s15, 5
    %p79 = por %p77, %p78
    %p80 = scmp.ne.s32.totalorder %s69, %s70
    %p81 = scmp.eq.s32.totalorder %s15, 0
    %p82 = por %p80, %p81
    %p83 = scmp.ne.s32.totalorder %s69, %s70
    %p84 = scmp.eq.s32.totalorder %s16, 5
    %p85 = por %p83, %p84
    %p87 = scmp.ne.s32.totalorder %s70, %s86
    %p88 = scmp.eq.s32.totalorder %s16, 0
    %p89 = por %p87, %p88
    %s91 = sadd.s32 %s90, 1
    %p94 = scmp.eq.s32.totalorder %s10, 5
    %p95 = scmp.ne.s32.totalorder %s90, %s92
    %p96 = scmp.eq.s32.totalorder %s10, 0
    %p97 = por %p95, %p96
    %p98 = scmp.ne.s32.totalorder %s90, %s92
    %p99 = scmp.eq.s32.totalorder %s15, 5
    %p100 = por %p98, %p99
    %p101 = scmp.ne.s32.totalorder %s92, %s93
    %p102 = scmp.eq.s32.totalorder %s15, 0
    %p103 = por %p101, %p102
    %p104 = scmp.ne.s32.totalorder %s92, %s93
    %p105 = scmp.eq.s32.totalorder %s16, 5
    %p106 = por %p104, %p105
    %p108 = scmp.ne.s32.totalorder %s93, %s107
    %p109 = scmp.eq.s32.totalorder %s16, 0
    %p110 = por %p108, %p109
    %s112 = sadd.s32 %s111, 1
    %p115 = scmp.eq.s32.totalorder %s10, 5
    %p116 = scmp.ne.s32.totalorder %s111, %s113
    %p117 = scmp.eq.s32.totalorder %s10, 0
    %p118 = por %p116, %p117
    %p119 = scmp.ne.s32.totalorder %s111, %s113
    %p120 = scmp.eq.s32.totalorder %s15, 5
    %p121 = por %p119, %p120
    %p122 = scmp.ne.s32.totalorder %s113, %s114
    %p123 = scmp.eq.s32.totalorder %s15, 0
    %p124 = por %p122, %p123
    %p125 = scmp.ne.s32.totalorder %s113, %s114
    %p126 = scmp.eq.s32.totalorder %s16, 5
    %p127 = por %p125, %p126
    %p129 = scmp.ne.s32.totalorder %s114, %s128
    %p130 = scmp.eq.s32.totalorder %s16, 0
    %p131 = por %p129, %p130
    %s132 = ssub.s32 %s17, %s29
    %s133 = ssub.s32 %s18, %s25
    %s134 = sor.u32 %s132, %s133
    %p135 = scmp.eq.s32.totalorder %s134, 0
    %s137 = sadd.s32 %s136, 1
    %s138 = scalar_select %p135, %s136, %s137
    %p141 = pneg %p135
    %p142 = scmp.eq.s32.totalorder %s10, 5
    %p143 = por %p141, %p142
    %p144 = scmp.ne.s32.totalorder %s136, %s139
    %p145 = scmp.eq.s32.totalorder %s10, 0
    %p146 = por %p144, %p145
    %p147 = scmp.ne.s32.totalorder %s136, %s139
    %p148 = scmp.eq.s32.totalorder %s15, 5
    %p149 = por %p147, %p148
    %p150 = scmp.ne.s32.totalorder %s139, %s140
    %p151 = scmp.eq.s32.totalorder %s15, 0
    %p152 = por %p150, %p151
    %p153 = scmp.ne.s32.totalorder %s139, %s140
    %p154 = scmp.eq.s32.totalorder %s16, 5
    %p155 = por %p153, %p154
    %p157 = scmp.ne.s32.totalorder %s140, %s156
    %p158 = scmp.eq.s32.totalorder %s16, 0
    %p159 = por %p157, %p158
    %p160 = scmp.le.s32.totalorder 1, %s10
    %p161 = scmp.lt.s32.totalorder %s10, 7
    %p162 = pnand %p160, %p161
    %p163 = pneg %p162
    // Predicated region
    $region9: #{basic_conv2d.1} parent=5 // pred_check
      _
    $region10: #{basic_conv2d.1} parent=5 // pred_check_branch
      %165 = sbr.rel (%p162) target = $region12
    $region11: #{basic_conv2d.1} parent=5 // pred_region
      %s166 = ssub.s32 %s10, 1
      // Predicated region
      $region13: #{basic_conv2d.1} parent=11 // pred_check
        %p167 = pneg %p103
      $region14: #{basic_conv2d.1} parent=11 // pred_check_branch
        %169 = sbr.rel (%p167) target = $region16
      $region15: #{basic_conv2d.1} parent=11 // pred_region
        _
      $region16: #{basic_conv2d.1} parent=11 // pred_fallthru
        _
      // Predicated region
      $region17: #{basic_conv2d.1} parent=11 // pred_check
        %p170 = pneg %p124
      $region18: #{basic_conv2d.1} parent=11 // pred_check_branch
        %172 = sbr.rel (%p170) target = $region20
      $region19: #{basic_conv2d.1} parent=11 // pred_region
        _
      $region20: #{basic_conv2d.1} parent=11 // pred_fallthru
        _
    $region12: #{basic_conv2d.1} parent=5 // pred_fallthru
      _
    %p173 = scmp.lt.s32.totalorder %s10, 6
    // Predicated region
    $region21: #{basic_conv2d.1} parent=5 // pred_check
      %p174 = pneg %p173
    $region22: #{basic_conv2d.1} parent=5 // pred_check_branch
      %176 = sbr.rel (%p174) target = $region24
    $region23: #{basic_conv2d.1} parent=5 // pred_region
      // Predicated region
      $region25: #{basic_conv2d.1} parent=23 // pred_check
        %p177 = pneg %p44
      $region26: #{basic_conv2d.1} parent=23 // pred_check_branch
        %179 = sbr.rel (%p177) target = $region28
      $region27: #{basic_conv2d.1} parent=23 // pred_region
        %s180 = smul.u32 21, %s18
        %s181 = ssub.s32 70, %s180
        %p182 = scmp.lt.s32.totalorder %s181, 21
        %s183 = scalar_select %p182, %s181, 21
        %s184 = smul.u32 4, %s183
        %p185 = scmp.lt.s32.totalorder %s17, 1
        %s186 = scalar_select %p185, %s17, 1
        %p187 = scmp.lt.s32.totalorder %s180, 69
        %s188 = scalar_select %p187, %s180, 69
        %s189 = smul.addr %s186, 70
        %s190 = sadd.s32 %s188, %s189
        %s191 = smul.addr %s190, 4
        %s192 = scalar_lea.vmem %s0, %s191
        %s193 = smul.u32 21, %s18
        %s194 = ssub.s32 70, %s193
        %p195 = scmp.lt.s32.totalorder %s194, 21
        %s196 = scalar_select %p195, %s194, 21
        %s197 = smul.u32 4, %s196
      $region28: #{basic_conv2d.1} parent=23 // pred_fallthru
        _
      // Predicated region
      $region29: #{basic_conv2d.1} parent=23 // pred_check
        %p198 = pneg %p76
      $region30: #{basic_conv2d.1} parent=23 // pred_check_branch
        %200 = sbr.rel (%p198) target = $region32
      $region31: #{basic_conv2d.1} parent=23 // pred_region
        %s201 = sadd.s32 %s18, 1
        %s202 = smul.u32 %s201, 3
        %s203 = smul.u32 7, %s202
        %p204 = scmp.lt.s32.totalorder %s17, 1
        %s205 = scalar_select %p204, %s17, 1
        %p206 = scmp.lt.s32.totalorder %s203, 69
        %s207 = scalar_select %p206, %s203, 69
        %s208 = smul.addr %s205, 70
        %s209 = sadd.s32 %s207, %s208
        %s210 = smul.addr %s209, 4
        %s211 = scalar_lea.vmem %s1, %s210
        %s212 = sadd.s32 %s18, 1
        %s213 = smul.u32 %s212, 3
        %s214 = smul.u32 7, %s213
      $region32: #{basic_conv2d.1} parent=23 // pred_fallthru
        _
    $region24: #{basic_conv2d.1} parent=5 // pred_fallthru
      _
    %p215 = scmp.le.s32.totalorder 1, %s10
    %p216 = scmp.lt.s32.totalorder %s10, 7
    %p217 = pnand %p215, %p216
    %p218 = pneg %p217
    // Predicated region
    $region33: #{basic_conv2d.1} parent=5 // pred_check
      _
    $region34: #{basic_conv2d.1} parent=5 // pred_check_branch
      %220 = sbr.rel (%p217) target = $region36
    $region35: #{basic_conv2d.1} parent=5 // pred_region
      %s221 = ssub.s32 %s10, 1
      %s222 = smul.u32 21, %s20
      %s223 = ssub.s32 70, %s222
      %p224 = scmp.lt.s32.totalorder %s223, 21
      %s225 = scalar_select %p224, %s223, 21
      %s226 = smul.u32 4, %s225
      %p227 = scmp.lt.s32.totalorder %s19, 1
      %s228 = scalar_select %p227, %s19, 1
      %p229 = scmp.lt.s32.totalorder %s222, 69
      %s230 = scalar_select %p229, %s222, 69
      %s231 = smul.addr %s228, 70
      %s232 = sadd.s32 %s230, %s231
      %s233 = smul.addr %s232, 4
      %s234 = scalar_lea.vmem %s0, %s233
      %p235 = pneg %p50
      %p236 = pneg %p47
      %s237 = sadd.s32 %s20, 1
      %s238 = smul.u32 %s237, 3
      %s239 = smul.u32 7, %s238
      %p240 = scmp.lt.s32.totalorder %s19, 1
      %s241 = scalar_select %p240, %s19, 1
      %p242 = scmp.lt.s32.totalorder %s239, 69
      %s243 = scalar_select %p242, %s239, 69
      %s244 = smul.addr %s241, 70
      %s245 = sadd.s32 %s243, %s244
      %s246 = smul.addr %s245, 4
      %s247 = scalar_lea.vmem %s1, %s246
      %p248 = pneg %p82
      %p249 = pneg %p79
      %p250 = pneg %p103
      %p251 = pneg %p100
      %p252 = pneg %p124
      %p253 = pneg %p121
      %p254 = pneg %p152
      %p255 = pneg %p149
      %s256 = smul.u32 21, %s20
      %p257 = scmp.lt.s32.totalorder %s19, 1
      %s258 = scalar_select %p257, %s19, 1
      %p259 = scmp.lt.s32.totalorder %s256, 62
      %s260 = scalar_select %p259, %s256, 62
      %s261 = smul.addr %s258, 63
      %s262 = sadd.s32 %s260, %s261
      %s263 = smul.addr %s262, 4
      %s264 = scalar_lea.vmem %s4, %s263
      %s265 = smul.u32 21, %s20
      %s266 = ssub.s32 70, %s265
      %p267 = scmp.lt.s32.totalorder %s266, 21
      %s268 = scalar_select %p267, %s266, 21
      %s269 = smul.u32 4, %s268
      %p270 = scmp.lt.s32.totalorder %s19, 1
      %s271 = scalar_select %p270, %s19, 1
      %p272 = scmp.lt.s32.totalorder %s265, 69
      %s273 = scalar_select %p272, %s265, 69
      %s274 = smul.addr %s271, 70
      %s275 = sadd.s32 %s273, %s274
      %s276 = smul.addr %s275, 4
      %s277 = scalar_lea.vmem %s0, %s276
      %s278 = smul.u32 21, %s20
      %s279 = ssub.s32 70, %s278
      %p280 = scmp.lt.s32.totalorder %s279, 21
      %s281 = scalar_select %p280, %s279, 21
      %s282 = smul.u32 4, %s281
      %s283 = sadd.s32 %s20, 1
      %s284 = smul.u32 %s283, 3
      %s285 = smul.u32 7, %s284
      %p286 = scmp.lt.s32.totalorder %s19, 1
      %s287 = scalar_select %p286, %s19, 1
      %p288 = scmp.lt.s32.totalorder %s285, 69
      %s289 = scalar_select %p288, %s285, 69
      %s290 = smul.addr %s287, 70
      %s291 = sadd.s32 %s289, %s290
      %s292 = smul.addr %s291, 4
      %s293 = scalar_lea.vmem %s1, %s292
      %s294 = sadd.s32 %s20, 1
      %s295 = smul.u32 %s294, 3
      %s296 = smul.u32 7, %s295
      %s297 = smul.u32 21, %s20
      %p298 = scmp.lt.s32.totalorder %s19, 1
      %s299 = scalar_select %p298, %s19, 1
      %p300 = scmp.lt.s32.totalorder %s297, 62
      %s301 = scalar_select %p300, %s297, 62
      %s302 = smul.addr %s299, 63
      %s303 = sadd.s32 %s301, %s302
      %s304 = smul.addr %s303, 4
      %s305 = scalar_lea.vmem %s4, %s304
      %s306 = smul.u32 21, %s20
      %v307 = vld [vmem:[%s277] sm:$0xf]
      %v308 = vld [vmem:[%s277 + $0x4] sm:$0xf]
      %v309 = vld [vmem:[%s277 + $0x8] sm:$0xf]
      %v310 = vld [vmem:[%s277 + $0xc] sm:$0xf]
      %v311 = vld [vmem:[%s277 + $0x10] sm:$0xf]
      %v312 = vld [vmem:[%s277 + $0x14] sm:$0xf]
      %v313 = vld [vmem:[%s277 + $0x18] sm:$0xf]
      %v314 = vld [vmem:[%s277 + $0x1c] sm:$0xf]
      %v315 = vld [vmem:[%s277 + $0x20] sm:$0xf]
      %v316 = vld [vmem:[%s277 + $0x24] sm:$0xf]
      %v317 = vld [vmem:[%s277 + $0x28] sm:$0xf]
      %v318 = vld [vmem:[%s277 + $0x2c] sm:$0xf]
      %v319 = vld [vmem:[%s277 + $0x30] sm:$0xf]
      %v320 = vld [vmem:[%s277 + $0x34] sm:$0xf]
      %v321 = vld [vmem:[%s277 + $0x38] sm:$0xf]
      %v322 = vld [vmem:[%s277 + $0x3c] sm:$0xf]
      %v323 = vld [vmem:[%s277 + $0x40] sm:$0xf]
      %v324 = vld [vmem:[%s277 + $0x44] sm:$0xf]
      %v325 = vld [vmem:[%s277 + $0x48] sm:$0xf]
      %v326 = vld [vmem:[%s277 + $0x4c] sm:$0xf]
      %v327 = vld [vmem:[%s277 + $0x50] sm:$0xf]
      %328 = vst [vmem:[#allocation2] sm:$0xf] %v307
      %329 = vst [vmem:[#allocation2 + $0x4] sm:$0xf] %v308
      %330 = vst [vmem:[#allocation2 + $0x8] sm:$0xf] %v309
      %331 = vst [vmem:[#allocation2 + $0xc] sm:$0xf] %v310
      %332 = vst [vmem:[#allocation2 + $0x10] sm:$0xf] %v311
      %333 = vst [vmem:[#allocation2 + $0x14] sm:$0xf] %v312
      %334 = vst [vmem:[#allocation2 + $0x18] sm:$0xf] %v313
      %335 = vst [vmem:[#allocation2 + $0x1c] sm:$0xf] %v314
      %336 = vst [vmem:[#allocation2 + $0x20] sm:$0xf] %v315
      %337 = vst [vmem:[#allocation2 + $0x24] sm:$0xf] %v316
      %338 = vst [vmem:[#allocation2 + $0x28] sm:$0xf] %v317
      %339 = vst [vmem:[#allocation2 + $0x2c] sm:$0xf] %v318
      %340 = vst [vmem:[#allocation2 + $0x30] sm:$0xf] %v319
      %341 = vst [vmem:[#allocation2 + $0x34] sm:$0xf] %v320
      %342 = vst [vmem:[#allocation2 + $0x38] sm:$0xf] %v321
      %343 = vst [vmem:[#allocation2 + $0x3c] sm:$0xf] %v322
      %344 = vst [vmem:[#allocation2 + $0x40] sm:$0xf] %v323
      %345 = vst [vmem:[#allocation2 + $0x44] sm:$0xf] %v324
      %346 = vst [vmem:[#allocation2 + $0x48] sm:$0xf] %v325
      %347 = vst [vmem:[#allocation2 + $0x4c] sm:$0xf] %v326
      %348 = vst [vmem:[#allocation2 + $0x50] sm:$0xf] %v327
      %v349 = vld [vmem:[%s293] sm:$0xf]
      %v350 = vld [vmem:[%s293 + $0x4] sm:$0xf]
      %v351 = vld [vmem:[%s293 + $0x8] sm:$0xf]
      %v352 = vld [vmem:[%s293 + $0xc] sm:$0xf]
      %v353 = vld [vmem:[%s293 + $0x10] sm:$0xf]
      %v354 = vld [vmem:[%s293 + $0x14] sm:$0xf]
      %v355 = vld [vmem:[%s293 + $0x18] sm:$0xf]
      %356 = vst [vmem:[#allocation2 + $0x54] sm:$0xf] %v349
      %357 = vst [vmem:[#allocation2 + $0x58] sm:$0xf] %v350
      %358 = vst [vmem:[#allocation2 + $0x5c] sm:$0xf] %v351
      %359 = vst [vmem:[#allocation2 + $0x60] sm:$0xf] %v352
      %360 = vst [vmem:[#allocation2 + $0x64] sm:$0xf] %v353
      %361 = vst [vmem:[#allocation2 + $0x68] sm:$0xf] %v354
      %362 = vst [vmem:[#allocation2 + $0x6c] sm:$0xf] %v355
      %v363 = vld [vmem:[#allocation2] sm:$0xf]
      %v364 = vld [vmem:[#allocation2 + $0x4] sm:$0xf]
      %v365 = vld [vmem:[#allocation2 + $0x8] sm:$0xf]
      %v366 = vld [vmem:[#allocation2 + $0xc] sm:$0xf]
      %v367 = vld [vmem:[#allocation2 + $0x10] sm:$0xf]
      %v368 = vld [vmem:[#allocation2 + $0x14] sm:$0xf]
      %v369 = vld [vmem:[#allocation2 + $0x18] sm:$0xf]
      %v370 = vld [vmem:[#allocation2 + $0x1c] sm:$0xf]
      %v371 = vld [vmem:[#allocation2 + $0x20] sm:$0xf]
      %v372 = vld [vmem:[#allocation2 + $0x24] sm:$0xf]
      %v373 = vld [vmem:[#allocation2 + $0x28] sm:$0xf]
      %v374 = vld [vmem:[#allocation2 + $0x2c] sm:$0xf]
      %v375 = vld [vmem:[#allocation2 + $0x30] sm:$0xf]
      %v376 = vld [vmem:[#allocation2 + $0x34] sm:$0xf]
      %v377 = vld [vmem:[#allocation2 + $0x38] sm:$0xf]
      %v378 = vld [vmem:[#allocation2 + $0x3c] sm:$0xf]
      %v379 = vld [vmem:[#allocation2 + $0x40] sm:$0xf]
      %v380 = vld [vmem:[#allocation2 + $0x44] sm:$0xf]
      %v381 = vld [vmem:[#allocation2 + $0x48] sm:$0xf]
      %v382 = vld [vmem:[#allocation2 + $0x4c] sm:$0xf]
      %v383 = vld [vmem:[#allocation2 + $0x50] sm:$0xf]
      %v384 = vld [vmem:[%s2] sm:$0xf]
      %v385 = vld [vmem:[%s2 + $0x4] sm:$0xf]
      %v386 = vld [vmem:[%s2 + $0x8] sm:$0xf]
      %v387 = vld [vmem:[%s2 + $0xc] sm:$0xf]
      %v388 = vld [vmem:[%s2 + $0x10] sm:$0xf]
      %v389 = vld [vmem:[%s2 + $0x14] sm:$0xf]
      %v390 = vld [vmem:[%s2 + $0x18] sm:$0xf]
      %v391 = vld [vmem:[%s2 + $0x1c] sm:$0xf]
      %v392 = vld [vmem:[%s2 + $0x20] sm:$0xf]
      %v393 = vld [vmem:[%s2 + $0x24] sm:$0xf]
      %v394 = vld [vmem:[%s2 + $0x28] sm:$0xf]
      %v395 = vld [vmem:[%s2 + $0x2c] sm:$0xf]
      %v396 = vld [vmem:[%s2 + $0x30] sm:$0xf]
      %v397 = vld [vmem:[%s2 + $0x34] sm:$0xf]
      %v398 = vld [vmem:[%s2 + $0x38] sm:$0xf]
      %v399 = vld [vmem:[%s2 + $0x3c] sm:$0xf]
      %v400 = vld [vmem:[#allocation2 + $0x54] sm:$0x1]
      %s401 = scalar_lea.vmem %s2, 64
      %v402 = vld [vmem:[%s401] sm:$0xf]
      %v403 = vld [vmem:[%s401 + $0x4] sm:$0xf]
      %v404 = vld [vmem:[%s401 + $0x8] sm:$0xf]
      %v405 = vld [vmem:[%s401 + $0xc] sm:$0xf]
      %v406 = vld [vmem:[%s401 + $0x10] sm:$0xf]
      %v407 = vld [vmem:[%s401 + $0x14] sm:$0xf]
      %v408 = vld [vmem:[%s401 + $0x18] sm:$0xf]
      %v409 = vld [vmem:[%s401 + $0x1c] sm:$0xf]
      %v410 = vld [vmem:[%s401 + $0x20] sm:$0xf]
      %v411 = vld [vmem:[%s401 + $0x24] sm:$0xf]
      %v412 = vld [vmem:[%s401 + $0x28] sm:$0xf]
      %v413 = vld [vmem:[%s401 + $0x2c] sm:$0xf]
      %v414 = vld [vmem:[%s401 + $0x30] sm:$0xf]
      %v415 = vld [vmem:[%s401 + $0x34] sm:$0xf]
      %v416 = vld [vmem:[%s401 + $0x38] sm:$0xf]
      %v417 = vld [vmem:[%s401 + $0x3c] sm:$0xf]
      %v440 = vunpack.c.l.b16 %v363
      %v441 = vunpack.c.l.b16 %v364
      %v442 = vunpack.c.l.b16 %v365
      %v443 = vunpack.c.l.b16 %v366
      %v444 = vunpack.c.l.b16 %v367
      %v445 = vunpack.c.l.b16 %v368
      %v446 = vunpack.c.l.b16 %v369
      %v447 = vunpack.c.l.b16 %v370
      %v448 = vunpack.c.l.b16 %v371
      %v449 = vunpack.c.l.b16 %v372
      %v450 = vunpack.c.l.b16 %v373
      %v451 = vunpack.c.l.b16 %v374
      %v452 = vunpack.c.l.b16 %v375
      %v453 = vunpack.c.l.b16 %v376
      %v454 = vunpack.c.l.b16 %v377
      %v455 = vunpack.c.l.b16 %v378
      %v456 = vunpack.c.l.b16 %v379
      %v457 = vunpack.c.l.b16 %v380
      %v458 = vunpack.c.l.b16 %v381
      %v459 = vunpack.c.l.b16 %v382
      %v460 = vunpack.c.l.b16 %v383
      %v461 = vunpack.c.l.b16 %v400
      %v462 = vpack.c.b16 %v441, %v440
      %v463 = vpack.c.b16 %v443, %v442
      %v464 = vpack.c.b16 %v445, %v444
      %v465 = vpack.c.b16 %v447, %v446
      %v466 = vpack.c.b16 %v449, %v448
      %v467 = vpack.c.b16 %v451, %v450
      %v468 = vpack.c.b16 %v453, %v452
      %v469 = vpack.c.b16 %v455, %v454
      %v470 = vpack.c.b16 %v457, %v456
      %v471 = vpack.c.b16 %v459, %v458
      %v472 = vpack.c.b16 %v461, %v460
      %vm473 = vsmask.f32 7424
      %v475 = vshrl.u32 %v462, 16
      %v477 = vshll.u32 %v462, 16
      %v479 = vrot.slane %v477, 1
      %v480 = vor.u32 %v475, %v479
      %v482 = vshll.u32 %v463, 16
      %v484 = vrot.slane %v482, 1
      %v485 = vsel %vm473, %v480, %v484
      %v486 = vshrl.u32 %v463, 16
      %v488 = vor.u32 %v486, %v484
      %v490 = vshll.u32 %v464, 16
      %v492 = vrot.slane %v490, 1
      %v493 = vsel %vm473, %v488, %v492
      %v494 = vshrl.u32 %v464, 16
      %v496 = vor.u32 %v494, %v492
      %v498 = vshll.u32 %v465, 16
      %v500 = vrot.slane %v498, 1
      %v501 = vsel %vm473, %v496, %v500
      %v502 = vshrl.u32 %v465, 16
      %v504 = vor.u32 %v502, %v500
      %v506 = vshll.u32 %v466, 16
      %v508 = vrot.slane %v506, 1
      %v509 = vsel %vm473, %v504, %v508
      %v510 = vshrl.u32 %v466, 16
      %v512 = vor.u32 %v510, %v508
      %v514 = vshll.u32 %v467, 16
      %v516 = vrot.slane %v514, 1
      %v517 = vsel %vm473, %v512, %v516
      %v518 = vshrl.u32 %v467, 16
      %v520 = vor.u32 %v518, %v516
      %v522 = vshll.u32 %v468, 16
      %v524 = vrot.slane %v522, 1
      %v525 = vsel %vm473, %v520, %v524
      %v526 = vshrl.u32 %v468, 16
      %v528 = vor.u32 %v526, %v524
      %v530 = vshll.u32 %v469, 16
      %v532 = vrot.slane %v530, 1
      %v533 = vsel %vm473, %v528, %v532
      %v534 = vshrl.u32 %v469, 16
      %v536 = vor.u32 %v534, %v532
      %v538 = vshll.u32 %v470, 16
      %v540 = vrot.slane %v538, 1
      %v541 = vsel %vm473, %v536, %v540
      %v542 = vshrl.u32 %v470, 16
      %v544 = vor.u32 %v542, %v540
      %v546 = vshll.u32 %v471, 16
      %v548 = vrot.slane %v546, 1
      %v549 = vsel %vm473, %v544, %v548
      %v550 = vshrl.u32 %v471, 16
      %v552 = vor.u32 %v550, %v548
      %v554 = vshll.u32 %v472, 16
      %v556 = vrot.slane %v554, 1
      %v557 = vsel %vm473, %v552, %v556
      %v558 = vshrl.u32 %v472, 16
      %v560 = vor.u32 %v558, %v556
      %v588 = vunpack.c.l.b16 %v402
      %v589 = vunpack.c.l.b16 %v403
      %v590 = vunpack.c.l.b16 %v404
      %v591 = vunpack.c.l.b16 %v405
      %v592 = vunpack.c.l.b16 %v406
      %v593 = vunpack.c.l.b16 %v407
      %v594 = vunpack.c.l.b16 %v408
      %v595 = vunpack.c.l.b16 %v409
      %v596 = vunpack.c.l.b16 %v410
      %v597 = vunpack.c.l.b16 %v411
      %v598 = vunpack.c.l.b16 %v412
      %v599 = vunpack.c.l.b16 %v413
      %v600 = vunpack.c.l.b16 %v414
      %v601 = vunpack.c.l.b16 %v415
      %v602 = vunpack.c.l.b16 %v416
      %v603 = vunpack.c.l.b16 %v417
      %v604 = vpack.c.b16 %v589, %v588
      %v605 = vpack.c.b16 %v591, %v590
      %v606 = vpack.c.b16 %v593, %v592
      %v607 = vpack.c.b16 %v595, %v594
      %v608 = vpack.c.b16 %v597, %v596
      %v609 = vpack.c.b16 %v599, %v598
      %v610 = vpack.c.b16 %v601, %v600
      %v611 = vpack.c.b16 %v603, %v602
      %620 = vmatpush.bf16.msra.mxu0 %v611
      %621 = vmatpush.bf16.msra.mxu0 %v610
      %622 = vmatpush.bf16.msra.mxu0 %v609
      %623 = vmatpush.bf16.msra.mxu0 %v608
      %624 = vmatpush.bf16.msra.mxu0 %v607
      %625 = vmatpush.bf16.msra.mxu0 %v606
      %626 = vmatpush.bf16.msra.mxu0 %v605
      %627 = vmatpush.bf16.msra.mxu0 %v604
      %628 = vmatmul.bf16.gmra.mxu0 %v485
      %v629 = vpop.f32.mrf.mxu0
      %v630 = vadd.f32 0.0, %v629
      %v631 = vpop.f32.mrf.mxu0
      %v632 = vadd.f32 0.0, %v631
      %633 = vmatmul.bf16.gmra.mxu0 %v493
      %v634 = vpop.f32.mrf.mxu0
      %v635 = vadd.f32 0.0, %v634
      %v636 = vpop.f32.mrf.mxu0
      %v637 = vadd.f32 0.0, %v636
      %638 = vmatmul.bf16.gmra.mxu0 %v501
      %v639 = vpop.f32.mrf.mxu0
      %v640 = vadd.f32 0.0, %v639
      %v641 = vpop.f32.mrf.mxu0
      %v642 = vadd.f32 0.0, %v641
      %643 = vmatmul.bf16.gmra.mxu0 %v509
      %v644 = vpop.f32.mrf.mxu0
      %v645 = vadd.f32 0.0, %v644
      %v646 = vpop.f32.mrf.mxu0
      %v647 = vadd.f32 0.0, %v646
      %648 = vmatmul.bf16.gmra.mxu0 %v517
      %v649 = vpop.f32.mrf.mxu0
      %v650 = vadd.f32 0.0, %v649
      %v651 = vpop.f32.mrf.mxu0
      %v652 = vadd.f32 0.0, %v651
      %653 = vmatmul.bf16.gmra.mxu0 %v525
      %v654 = vpop.f32.mrf.mxu0
      %v655 = vadd.f32 0.0, %v654
      %v656 = vpop.f32.mrf.mxu0
      %v657 = vadd.f32 0.0, %v656
      %658 = vmatmul.bf16.gmra.mxu0 %v533
      %v659 = vpop.f32.mrf.mxu0
      %v660 = vadd.f32 0.0, %v659
      %v661 = vpop.f32.mrf.mxu0
      %v662 = vadd.f32 0.0, %v661
      %663 = vmatmul.bf16.gmra.mxu0 %v541
      %v664 = vpop.f32.mrf.mxu0
      %v665 = vadd.f32 0.0, %v664
      %v666 = vpop.f32.mrf.mxu0
      %v667 = vadd.f32 0.0, %v666
      %668 = vmatmul.bf16.gmra.mxu0 %v549
      %v669 = vpop.f32.mrf.mxu0
      %v670 = vadd.f32 0.0, %v669
      %v671 = vpop.f32.mrf.mxu0
      %v672 = vadd.f32 0.0, %v671
      %673 = vmatmul.bf16.gmra.mxu0 %v557
      %v674 = vpop.f32.mrf.mxu0
      %v675 = vadd.f32 0.0, %v674
      %v676 = vpop.f32.mrf.mxu0
      %v677 = vadd.f32 0.0, %v676
      %678 = vmatmul.bf16.gmra.mxu0 %v560
      %v679 = vpop.f32.mrf.mxu0
      %v680 = vadd.f32 0.0, %v679
      %v681 = vpop.f32.mrf.mxu0
      %682 = vdwg.mxu0
      %v683 = vpack.c.b16 %v460, %v460
      %v711 = vunpack.c.l.b16 %v384
      %v712 = vunpack.c.l.b16 %v385
      %v713 = vunpack.c.l.b16 %v386
      %v714 = vunpack.c.l.b16 %v387
      %v715 = vunpack.c.l.b16 %v388
      %v716 = vunpack.c.l.b16 %v389
      %v717 = vunpack.c.l.b16 %v390
      %v718 = vunpack.c.l.b16 %v391
      %v719 = vunpack.c.l.b16 %v392
      %v720 = vunpack.c.l.b16 %v393
      %v721 = vunpack.c.l.b16 %v394
      %v722 = vunpack.c.l.b16 %v395
      %v723 = vunpack.c.l.b16 %v396
      %v724 = vunpack.c.l.b16 %v397
      %v725 = vunpack.c.l.b16 %v398
      %v726 = vunpack.c.l.b16 %v399
      %v727 = vpack.c.b16 %v712, %v711
      %v728 = vpack.c.b16 %v714, %v713
      %v729 = vpack.c.b16 %v716, %v715
      %v730 = vpack.c.b16 %v718, %v717
      %v731 = vpack.c.b16 %v720, %v719
      %v732 = vpack.c.b16 %v722, %v721
      %v733 = vpack.c.b16 %v724, %v723
      %v734 = vpack.c.b16 %v726, %v725
      %743 = vmatpush.bf16.msra.mxu0 %v734
      %744 = vmatpush.bf16.msra.mxu0 %v733
      %745 = vmatpush.bf16.msra.mxu0 %v732
      %746 = vmatpush.bf16.msra.mxu0 %v731
      %747 = vmatpush.bf16.msra.mxu0 %v730
      %748 = vmatpush.bf16.msra.mxu0 %v729
      %749 = vmatpush.bf16.msra.mxu0 %v728
      %750 = vmatpush.bf16.msra.mxu0 %v727
      %751 = vmatmul.bf16.gmra.mxu0 %v462
      %v752 = vpop.f32.mrf.mxu0
      %v753 = vadd.f32 %v630, %v752
      %v754 = vpop.f32.mrf.mxu0
      %v755 = vadd.f32 %v632, %v754
      %756 = vmatmul.bf16.gmra.mxu0 %v463
      %v757 = vpop.f32.mrf.mxu0
      %v758 = vadd.f32 %v635, %v757
      %v759 = vpop.f32.mrf.mxu0
      %v760 = vadd.f32 %v637, %v759
      %761 = vmatmul.bf16.gmra.mxu0 %v464
      %v762 = vpop.f32.mrf.mxu0
      %v763 = vadd.f32 %v640, %v762
      %v764 = vpop.f32.mrf.mxu0
      %v765 = vadd.f32 %v642, %v764
      %766 = vmatmul.bf16.gmra.mxu0 %v465
      %v767 = vpop.f32.mrf.mxu0
      %v768 = vadd.f32 %v645, %v767
      %v769 = vpop.f32.mrf.mxu0
      %v770 = vadd.f32 %v647, %v769
      %771 = vmatmul.bf16.gmra.mxu0 %v466
      %v772 = vpop.f32.mrf.mxu0
      %v773 = vadd.f32 %v650, %v772
      %v774 = vpop.f32.mrf.mxu0
      %v775 = vadd.f32 %v652, %v774
      %776 = vmatmul.bf16.gmra.mxu0 %v467
      %v777 = vpop.f32.mrf.mxu0
      %v778 = vadd.f32 %v655, %v777
      %v779 = vpop.f32.mrf.mxu0
      %v780 = vadd.f32 %v657, %v779
      %781 = vmatmul.bf16.gmra.mxu0 %v468
      %v782 = vpop.f32.mrf.mxu0
      %v783 = vadd.f32 %v660, %v782
      %v784 = vpop.f32.mrf.mxu0
      %v785 = vadd.f32 %v662, %v784
      %786 = vmatmul.bf16.gmra.mxu0 %v469
      %v787 = vpop.f32.mrf.mxu0
      %v788 = vadd.f32 %v665, %v787
      %v789 = vpop.f32.mrf.mxu0
      %v790 = vadd.f32 %v667, %v789
      %791 = vmatmul.bf16.gmra.mxu0 %v470
      %v792 = vpop.f32.mrf.mxu0
      %v793 = vadd.f32 %v670, %v792
      %v794 = vpop.f32.mrf.mxu0
      %v795 = vadd.f32 %v672, %v794
      %796 = vmatmul.bf16.gmra.mxu0 %v471
      %v797 = vpop.f32.mrf.mxu0
      %v798 = vadd.f32 %v675, %v797
      %v799 = vpop.f32.mrf.mxu0
      %v800 = vadd.f32 %v677, %v799
      %801 = vmatmul.bf16.gmra.mxu0 %v683
      %v802 = vpop.f32.mrf.mxu0
      %v803 = vadd.f32 %v680, %v802
      %v804 = vpop.f32.mrf.mxu0
      %805 = vdwg.mxu0
      %v806 = vld [vmem:[#allocation2] sm:$0xe]
      %s807 = scalar_lea.vmem %s2, 128
      %v808 = vld [vmem:[%s807] sm:$0xf]
      %v809 = vld [vmem:[%s807 + $0x4] sm:$0xf]
      %v810 = vld [vmem:[%s807 + $0x8] sm:$0xf]
      %v811 = vld [vmem:[%s807 + $0xc] sm:$0xf]
      %v812 = vld [vmem:[%s807 + $0x10] sm:$0xf]
      %v813 = vld [vmem:[%s807 + $0x14] sm:$0xf]
      %v814 = vld [vmem:[%s807 + $0x18] sm:$0xf]
      %v815 = vld [vmem:[%s807 + $0x1c] sm:$0xf]
      %v816 = vld [vmem:[%s807 + $0x20] sm:$0xf]
      %v817 = vld [vmem:[%s807 + $0x24] sm:$0xf]
      %v818 = vld [vmem:[%s807 + $0x28] sm:$0xf]
      %v819 = vld [vmem:[%s807 + $0x2c] sm:$0xf]
      %v820 = vld [vmem:[%s807 + $0x30] sm:$0xf]
      %v821 = vld [vmem:[%s807 + $0x34] sm:$0xf]
      %v822 = vld [vmem:[%s807 + $0x38] sm:$0xf]
      %v823 = vld [vmem:[%s807 + $0x3c] sm:$0xf]
      %v825 = vunpack.c.l.b16 %v806
      %v826 = vpack.c.b16 %v441, %v825
      %vm827 = vcmask 1046528
      %v828 = vrot.slane %v826, 1
      %v829 = vrot.slane %v463, 1
      %v830 = vsel %vm827, %v828, %v829
      %v831 = vrot.slane %v464, 1
      %v832 = vsel %vm827, %v829, %v831
      %v833 = vrot.slane %v465, 1
      %v834 = vsel %vm827, %v831, %v833
      %v835 = vrot.slane %v466, 1
      %v836 = vsel %vm827, %v833, %v835
      %v837 = vrot.slane %v467, 1
      %v838 = vsel %vm827, %v835, %v837
      %v839 = vrot.slane %v468, 1
      %v840 = vsel %vm827, %v837, %v839
      %v841 = vrot.slane %v469, 1
      %v842 = vsel %vm827, %v839, %v841
      %v843 = vrot.slane %v470, 1
      %v844 = vsel %vm827, %v841, %v843
      %v845 = vrot.slane %v471, 1
      %v846 = vsel %vm827, %v843, %v845
      %v847 = vrot.slane %v472, 1
      %v848 = vsel %vm827, %v845, %v847
      %v876 = vunpack.c.l.b16 %v808
      %v877 = vunpack.c.l.b16 %v809
      %v878 = vunpack.c.l.b16 %v810
      %v879 = vunpack.c.l.b16 %v811
      %v880 = vunpack.c.l.b16 %v812
      %v881 = vunpack.c.l.b16 %v813
      %v882 = vunpack.c.l.b16 %v814
      %v883 = vunpack.c.l.b16 %v815
      %v884 = vunpack.c.l.b16 %v816
      %v885 = vunpack.c.l.b16 %v817
      %v886 = vunpack.c.l.b16 %v818
      %v887 = vunpack.c.l.b16 %v819
      %v888 = vunpack.c.l.b16 %v820
      %v889 = vunpack.c.l.b16 %v821
      %v890 = vunpack.c.l.b16 %v822
      %v891 = vunpack.c.l.b16 %v823
      %v892 = vpack.c.b16 %v877, %v876
      %v893 = vpack.c.b16 %v879, %v878
      %v894 = vpack.c.b16 %v881, %v880
      %v895 = vpack.c.b16 %v883, %v882
      %v896 = vpack.c.b16 %v885, %v884
      %v897 = vpack.c.b16 %v887, %v886
      %v898 = vpack.c.b16 %v889, %v888
      %v899 = vpack.c.b16 %v891, %v890
      %908 = vmatpush.bf16.msra.mxu0 %v899
      %909 = vmatpush.bf16.msra.mxu0 %v898
      %910 = vmatpush.bf16.msra.mxu0 %v897
      %911 = vmatpush.bf16.msra.mxu0 %v896
      %912 = vmatpush.bf16.msra.mxu0 %v895
      %913 = vmatpush.bf16.msra.mxu0 %v894
      %914 = vmatpush.bf16.msra.mxu0 %v893
      %915 = vmatpush.bf16.msra.mxu0 %v892
      %916 = vmatmul.bf16.gmra.mxu0 %v830
      %v917 = vpop.f32.mrf.mxu0
      %v918 = vadd.f32 0.0, %v917
      %v919 = vpop.f32.mrf.mxu0
      %v920 = vadd.f32 0.0, %v919
      %921 = vmatmul.bf16.gmra.mxu0 %v832
      %v922 = vpop.f32.mrf.mxu0
      %v923 = vadd.f32 0.0, %v922
      %v924 = vpop.f32.mrf.mxu0
      %v925 = vadd.f32 0.0, %v924
      %926 = vmatmul.bf16.gmra.mxu0 %v834
      %v927 = vpop.f32.mrf.mxu0
      %v928 = vadd.f32 0.0, %v927
      %v929 = vpop.f32.mrf.mxu0
      %v930 = vadd.f32 0.0, %v929
      %931 = vmatmul.bf16.gmra.mxu0 %v836
      %v932 = vpop.f32.mrf.mxu0
      %v933 = vadd.f32 0.0, %v932
      %v934 = vpop.f32.mrf.mxu0
      %v935 = vadd.f32 0.0, %v934
      %936 = vmatmul.bf16.gmra.mxu0 %v838
      %v937 = vpop.f32.mrf.mxu0
      %v938 = vadd.f32 0.0, %v937
      %v939 = vpop.f32.mrf.mxu0
      %v940 = vadd.f32 0.0, %v939
      %941 = vmatmul.bf16.gmra.mxu0 %v840
      %v942 = vpop.f32.mrf.mxu0
      %v943 = vadd.f32 0.0, %v942
      %v944 = vpop.f32.mrf.mxu0
      %v945 = vadd.f32 0.0, %v944
      %946 = vmatmul.bf16.gmra.mxu0 %v842
      %v947 = vpop.f32.mrf.mxu0
      %v948 = vadd.f32 0.0, %v947
      %v949 = vpop.f32.mrf.mxu0
      %v950 = vadd.f32 0.0, %v949
      %951 = vmatmul.bf16.gmra.mxu0 %v844
      %v952 = vpop.f32.mrf.mxu0
      %v953 = vadd.f32 0.0, %v952
      %v954 = vpop.f32.mrf.mxu0
      %v955 = vadd.f32 0.0, %v954
      %956 = vmatmul.bf16.gmra.mxu0 %v846
      %v957 = vpop.f32.mrf.mxu0
      %v958 = vadd.f32 0.0, %v957
      %v959 = vpop.f32.mrf.mxu0
      %v960 = vadd.f32 0.0, %v959
      %961 = vmatmul.bf16.gmra.mxu0 %v848
      %v962 = vpop.f32.mrf.mxu0
      %v963 = vadd.f32 0.0, %v962
      %v964 = vpop.f32.mrf.mxu0
      %v965 = vadd.f32 0.0, %v964
      %966 = vmatmul.bf16.gmra.mxu0 %v847
      %v967 = vpop.f32.mrf.mxu0
      %v968 = vadd.f32 0.0, %v967
      %v969 = vpop.f32.mrf.mxu0
      %970 = vdwg.mxu0
      %v971 = vadd.f32 %v753, %v918
      %v972 = vadd.f32 %v755, %v920
      %v973 = vadd.f32 %v758, %v923
      %v974 = vadd.f32 %v760, %v925
      %v975 = vadd.f32 %v763, %v928
      %v976 = vadd.f32 %v765, %v930
      %v977 = vadd.f32 %v768, %v933
      %v978 = vadd.f32 %v770, %v935
      %v979 = vadd.f32 %v773, %v938
      %v980 = vadd.f32 %v775, %v940
      %v981 = vadd.f32 %v778, %v943
      %v982 = vadd.f32 %v780, %v945
      %v983 = vadd.f32 %v783, %v948
      %v984 = vadd.f32 %v785, %v950
      %v985 = vadd.f32 %v788, %v953
      %v986 = vadd.f32 %v790, %v955
      %v987 = vadd.f32 %v793, %v958
      %v988 = vadd.f32 %v795, %v960
      %v989 = vadd.f32 %v798, %v963
      %v990 = vadd.f32 %v800, %v965
      %v991 = vadd.f32 %v803, %v968
      %v992 = vld [vmem:[#allocation2 + $0xc] sm:$0xf]
      %v993 = vld [vmem:[#allocation2 + $0x10] sm:$0xf]
      %v994 = vld [vmem:[#allocation2 + $0x14] sm:$0xf]
      %v995 = vld [vmem:[#allocation2 + $0x18] sm:$0xf]
      %v996 = vld [vmem:[#allocation2 + $0x1c] sm:$0xf]
      %v997 = vld [vmem:[#allocation2 + $0x20] sm:$0xf]
      %v998 = vld [vmem:[#allocation2 + $0x24] sm:$0xf]
      %v999 = vld [vmem:[#allocation2 + $0x28] sm:$0xf]
      %v1000 = vld [vmem:[#allocation2 + $0x2c] sm:$0xf]
      %v1001 = vld [vmem:[#allocation2 + $0x30] sm:$0xf]
      %v1002 = vld [vmem:[#allocation2 + $0x34] sm:$0xf]
      %v1003 = vld [vmem:[#allocation2 + $0x38] sm:$0xf]
      %v1004 = vld [vmem:[#allocation2 + $0x3c] sm:$0xf]
      %v1005 = vld [vmem:[#allocation2 + $0x40] sm:$0xf]
      %v1006 = vld [vmem:[#allocation2 + $0x44] sm:$0xf]
      %v1007 = vld [vmem:[#allocation2 + $0x48] sm:$0xf]
      %v1008 = vld [vmem:[#allocation2 + $0x4c] sm:$0xf]
      %v1009 = vld [vmem:[#allocation2 + $0x50] sm:$0xf]
      %v1010 = vld [vmem:[#allocation2 + $0x54] sm:$0xf]
      %v1011 = vld [vmem:[#allocation2 + $0x58] sm:$0xf]
      %v1012 = vld [vmem:[#allocation2 + $0x5c] sm:$0xf]
      %s1013 = scalar_lea.vmem %s2, 192
      %v1014 = vld [vmem:[%s1013] sm:$0xf]
      %v1015 = vld [vmem:[%s1013 + $0x4] sm:$0xf]
      %v1016 = vld [vmem:[%s1013 + $0x8] sm:$0xf]
      %v1017 = vld [vmem:[%s1013 + $0xc] sm:$0xf]
      %v1018 = vld [vmem:[%s1013 + $0x10] sm:$0xf]
      %v1019 = vld [vmem:[%s1013 + $0x14] sm:$0xf]
      %v1020 = vld [vmem:[%s1013 + $0x18] sm:$0xf]
      %v1021 = vld [vmem:[%s1013 + $0x1c] sm:$0xf]
      %v1022 = vld [vmem:[%s1013 + $0x20] sm:$0xf]
      %v1023 = vld [vmem:[%s1013 + $0x24] sm:$0xf]
      %v1024 = vld [vmem:[%s1013 + $0x28] sm:$0xf]
      %v1025 = vld [vmem:[%s1013 + $0x2c] sm:$0xf]
      %v1026 = vld [vmem:[%s1013 + $0x30] sm:$0xf]
      %v1027 = vld [vmem:[%s1013 + $0x34] sm:$0xf]
      %v1028 = vld [vmem:[%s1013 + $0x38] sm:$0xf]
      %v1029 = vld [vmem:[%s1013 + $0x3c] sm:$0xf]
      %v1051 = vunpack.c.l.b16 %v992
      %v1052 = vunpack.c.l.b16 %v993
      %v1053 = vunpack.c.l.b16 %v994
      %v1054 = vunpack.c.l.b16 %v995
      %v1055 = vunpack.c.l.b16 %v996
      %v1056 = vunpack.c.l.b16 %v997
      %v1057 = vunpack.c.l.b16 %v998
      %v1058 = vunpack.c.l.b16 %v999
      %v1059 = vunpack.c.l.b16 %v1000
      %v1060 = vunpack.c.l.b16 %v1001
      %v1061 = vunpack.c.l.b16 %v1002
      %v1062 = vunpack.c.l.b16 %v1003
      %v1063 = vunpack.c.l.b16 %v1004
      %v1064 = vunpack.c.l.b16 %v1005
      %v1065 = vunpack.c.l.b16 %v1006
      %v1066 = vunpack.c.l.b16 %v1007
      %v1067 = vunpack.c.l.b16 %v1008
      %v1068 = vunpack.c.l.b16 %v1009
      %v1069 = vunpack.c.l.b16 %v1010
      %v1070 = vunpack.c.l.b16 %v1011
      %v1071 = vunpack.c.l.b16 %v1012
      %v1072 = vpack.c.b16 %v1052, %v1051
      %v1073 = vpack.c.b16 %v1054, %v1053
      %v1074 = vpack.c.b16 %v1056, %v1055
      %v1075 = vpack.c.b16 %v1058, %v1057
      %v1076 = vpack.c.b16 %v1060, %v1059
      %v1077 = vpack.c.b16 %v1062, %v1061
      %v1078 = vpack.c.b16 %v1064, %v1063
      %v1079 = vpack.c.b16 %v1066, %v1065
      %v1080 = vpack.c.b16 %v1068, %v1067
      %v1081 = vpack.c.b16 %v1070, %v1069
      %v1082 = vpack.c.b16 %v1071, %v1071
      %v1110 = vunpack.c.l.b16 %v1014
      %v1111 = vunpack.c.l.b16 %v1015
      %v1112 = vunpack.c.l.b16 %v1016
      %v1113 = vunpack.c.l.b16 %v1017
      %v1114 = vunpack.c.l.b16 %v1018
      %v1115 = vunpack.c.l.b16 %v1019
      %v1116 = vunpack.c.l.b16 %v1020
      %v1117 = vunpack.c.l.b16 %v1021
      %v1118 = vunpack.c.l.b16 %v1022
      %v1119 = vunpack.c.l.b16 %v1023
      %v1120 = vunpack.c.l.b16 %v1024
      %v1121 = vunpack.c.l.b16 %v1025
      %v1122 = vunpack.c.l.b16 %v1026
      %v1123 = vunpack.c.l.b16 %v1027
      %v1124 = vunpack.c.l.b16 %v1028
      %v1125 = vunpack.c.l.b16 %v1029
      %v1126 = vpack.c.b16 %v1111, %v1110
      %v1127 = vpack.c.b16 %v1113, %v1112
      %v1128 = vpack.c.b16 %v1115, %v1114
      %v1129 = vpack.c.b16 %v1117, %v1116
      %v1130 = vpack.c.b16 %v1119, %v1118
      %v1131 = vpack.c.b16 %v1121, %v1120
      %v1132 = vpack.c.b16 %v1123, %v1122
      %v1133 = vpack.c.b16 %v1125, %v1124
      %1142 = vmatpush.bf16.msra.mxu0 %v1133
      %1143 = vmatpush.bf16.msra.mxu0 %v1132
      %1144 = vmatpush.bf16.msra.mxu0 %v1131
      %1145 = vmatpush.bf16.msra.mxu0 %v1130
      %1146 = vmatpush.bf16.msra.mxu0 %v1129
      %1147 = vmatpush.bf16.msra.mxu0 %v1128
      %1148 = vmatpush.bf16.msra.mxu0 %v1127
      %1149 = vmatpush.bf16.msra.mxu0 %v1126
      %1150 = vmatmul.bf16.gmra.mxu0 %v1072
      %v1151 = vpop.f32.mrf.mxu0
      %v1152 = vadd.f32 0.0, %v1151
      %v1153 = vpop.f32.mrf.mxu0
      %v1154 = vadd.f32 0.0, %v1153
      %1155 = vmatmul.bf16.gmra.mxu0 %v1073
      %v1156 = vpop.f32.mrf.mxu0
      %v1157 = vadd.f32 0.0, %v1156
      %v1158 = vpop.f32.mrf.mxu0
      %v1159 = vadd.f32 0.0, %v1158
      %1160 = vmatmul.bf16.gmra.mxu0 %v1074
      %v1161 = vpop.f32.mrf.mxu0
      %v1162 = vadd.f32 0.0, %v1161
      %v1163 = vpop.f32.mrf.mxu0
      %v1164 = vadd.f32 0.0, %v1163
      %1165 = vmatmul.bf16.gmra.mxu0 %v1075
      %v1166 = vpop.f32.mrf.mxu0
      %v1167 = vadd.f32 0.0, %v1166
      %v1168 = vpop.f32.mrf.mxu0
      %v1169 = vadd.f32 0.0, %v1168
      %1170 = vmatmul.bf16.gmra.mxu0 %v1076
      %v1171 = vpop.f32.mrf.mxu0
      %v1172 = vadd.f32 0.0, %v1171
      %v1173 = vpop.f32.mrf.mxu0
      %v1174 = vadd.f32 0.0, %v1173
      %1175 = vmatmul.bf16.gmra.mxu0 %v1077
      %v1176 = vpop.f32.mrf.mxu0
      %v1177 = vadd.f32 0.0, %v1176
      %v1178 = vpop.f32.mrf.mxu0
      %v1179 = vadd.f32 0.0, %v1178
      %1180 = vmatmul.bf16.gmra.mxu0 %v1078
      %v1181 = vpop.f32.mrf.mxu0
      %v1182 = vadd.f32 0.0, %v1181
      %v1183 = vpop.f32.mrf.mxu0
      %v1184 = vadd.f32 0.0, %v1183
      %1185 = vmatmul.bf16.gmra.mxu0 %v1079
      %v1186 = vpop.f32.mrf.mxu0
      %v1187 = vadd.f32 0.0, %v1186
      %v1188 = vpop.f32.mrf.mxu0
      %v1189 = vadd.f32 0.0, %v1188
      %1190 = vmatmul.bf16.gmra.mxu0 %v1080
      %v1191 = vpop.f32.mrf.mxu0
      %v1192 = vadd.f32 0.0, %v1191
      %v1193 = vpop.f32.mrf.mxu0
      %v1194 = vadd.f32 0.0, %v1193
      %1195 = vmatmul.bf16.gmra.mxu0 %v1081
      %v1196 = vpop.f32.mrf.mxu0
      %v1197 = vadd.f32 0.0, %v1196
      %v1198 = vpop.f32.mrf.mxu0
      %v1199 = vadd.f32 0.0, %v1198
      %1200 = vmatmul.bf16.gmra.mxu0 %v1082
      %v1201 = vpop.f32.mrf.mxu0
      %v1202 = vadd.f32 0.0, %v1201
      %v1203 = vpop.f32.mrf.mxu0
      %1204 = vdwg.mxu0
      %v1205 = vadd.f32 %v971, %v1152
      %v1206 = vadd.f32 %v972, %v1154
      %v1207 = vadd.f32 %v973, %v1157
      %v1208 = vadd.f32 %v974, %v1159
      %v1209 = vadd.f32 %v975, %v1162
      %v1210 = vadd.f32 %v976, %v1164
      %v1211 = vadd.f32 %v977, %v1167
      %v1212 = vadd.f32 %v978, %v1169
      %v1213 = vadd.f32 %v979, %v1172
      %v1214 = vadd.f32 %v980, %v1174
      %v1215 = vadd.f32 %v981, %v1177
      %v1216 = vadd.f32 %v982, %v1179
      %v1217 = vadd.f32 %v983, %v1182
      %v1218 = vadd.f32 %v984, %v1184
      %v1219 = vadd.f32 %v985, %v1187
      %v1220 = vadd.f32 %v986, %v1189
      %v1221 = vadd.f32 %v987, %v1192
      %v1222 = vadd.f32 %v988, %v1194
      %v1223 = vadd.f32 %v989, %v1197
      %v1224 = vadd.f32 %v990, %v1199
      %v1225 = vadd.f32 %v991, %v1202
      %v1226 = vld [vmem:[#allocation2 + $0xc] sm:$0xf]
      %v1227 = vld [vmem:[#allocation2 + $0x10] sm:$0xf]
      %v1228 = vld [vmem:[#allocation2 + $0x14] sm:$0xf]
      %v1229 = vld [vmem:[#allocation2 + $0x18] sm:$0xf]
      %v1230 = vld [vmem:[#allocation2 + $0x1c] sm:$0xf]
      %v1231 = vld [vmem:[#allocation2 + $0x20] sm:$0xf]
      %v1232 = vld [vmem:[#allocation2 + $0x24] sm:$0xf]
      %v1233 = vld [vmem:[#allocation2 + $0x28] sm:$0xf]
      %v1234 = vld [vmem:[#allocation2 + $0x2c] sm:$0xf]
      %v1235 = vld [vmem:[#allocation2 + $0x30] sm:$0xf]
      %v1236 = vld [vmem:[#allocation2 + $0x34] sm:$0xf]
      %v1237 = vld [vmem:[#allocation2 + $0x38] sm:$0xf]
      %v1238 = vld [vmem:[#allocation2 + $0x3c] sm:$0xf]
      %v1239 = vld [vmem:[#allocation2 + $0x40] sm:$0xf]
      %v1240 = vld [vmem:[#allocation2 + $0x44] sm:$0xf]
      %v1241 = vld [vmem:[#allocation2 + $0x48] sm:$0xf]
      %v1242 = vld [vmem:[#allocation2 + $0x4c] sm:$0xf]
      %v1243 = vld [vmem:[#allocation2 + $0x50] sm:$0xf]
      %v1244 = vld [vmem:[#allocation2 + $0x54] sm:$0xf]
      %v1245 = vld [vmem:[#allocation2 + $0x58] sm:$0xf]
      %v1246 = vld [vmem:[#allocation2 + $0x5c] sm:$0xf]
      %v1247 = vld [vmem:[#allocation2 + $0x60] sm:$0x1]
      %s1248 = scalar_lea.vmem %s2, 256
      %v1249 = vld [vmem:[%s1248] sm:$0xf]
      %v1250 = vld [vmem:[%s1248 + $0x4] sm:$0xf]
      %v1251 = vld [vmem:[%s1248 + $0x8] sm:$0xf]
      %v1252 = vld [vmem:[%s1248 + $0xc] sm:$0xf]
      %v1253 = vld [vmem:[%s1248 + $0x10] sm:$0xf]
      %v1254 = vld [vmem:[%s1248 + $0x14] sm:$0xf]
      %v1255 = vld [vmem:[%s1248 + $0x18] sm:$0xf]
      %v1256 = vld [vmem:[%s1248 + $0x1c] sm:$0xf]
      %v1257 = vld [vmem:[%s1248 + $0x20] sm:$0xf]
      %v1258 = vld [vmem:[%s1248 + $0x24] sm:$0xf]
      %v1259 = vld [vmem:[%s1248 + $0x28] sm:$0xf]
      %v1260 = vld [vmem:[%s1248 + $0x2c] sm:$0xf]
      %v1261 = vld [vmem:[%s1248 + $0x30] sm:$0xf]
      %v1262 = vld [vmem:[%s1248 + $0x34] sm:$0xf]
      %v1263 = vld [vmem:[%s1248 + $0x38] sm:$0xf]
      %v1264 = vld [vmem:[%s1248 + $0x3c] sm:$0xf]
      %v1287 = vunpack.c.l.b16 %v1226
      %v1288 = vunpack.c.l.b16 %v1227
      %v1289 = vunpack.c.l.b16 %v1228
      %v1290 = vunpack.c.l.b16 %v1229
      %v1291 = vunpack.c.l.b16 %v1230
      %v1292 = vunpack.c.l.b16 %v1231
      %v1293 = vunpack.c.l.b16 %v1232
      %v1294 = vunpack.c.l.b16 %v1233
      %v1295 = vunpack.c.l.b16 %v1234
      %v1296 = vunpack.c.l.b16 %v1235
      %v1297 = vunpack.c.l.b16 %v1236
      %v1298 = vunpack.c.l.b16 %v1237
      %v1299 = vunpack.c.l.b16 %v1238
      %v1300 = vunpack.c.l.b16 %v1239
      %v1301 = vunpack.c.l.b16 %v1240
      %v1302 = vunpack.c.l.b16 %v1241
      %v1303 = vunpack.c.l.b16 %v1242
      %v1304 = vunpack.c.l.b16 %v1243
      %v1305 = vunpack.c.l.b16 %v1244
      %v1306 = vunpack.c.l.b16 %v1245
      %v1307 = vunpack.c.l.b16 %v1246
      %v1308 = vunpack.c.l.b16 %v1247
      %v1309 = vpack.c.b16 %v1288, %v1287
      %v1310 = vpack.c.b16 %v1290, %v1289
      %v1311 = vpack.c.b16 %v1292, %v1291
      %v1312 = vpack.c.b16 %v1294, %v1293
      %v1313 = vpack.c.b16 %v1296, %v1295
      %v1314 = vpack.c.b16 %v1298, %v1297
      %v1315 = vpack.c.b16 %v1300, %v1299
      %v1316 = vpack.c.b16 %v1302, %v1301
      %v1317 = vpack.c.b16 %v1304, %v1303
      %v1318 = vpack.c.b16 %v1306, %v1305
      %v1319 = vpack.c.b16 %v1308, %v1307
      %v1321 = vshrl.u32 %v1309, 16
      %v1323 = vshll.u32 %v1309, 16
      %v1325 = vrot.slane %v1323, 1
      %v1326 = vor.u32 %v1321, %v1325
      %v1328 = vshll.u32 %v1310, 16
      %v1330 = vrot.slane %v1328, 1
      %v1331 = vsel %vm473, %v1326, %v1330
      %v1332 = vshrl.u32 %v1310, 16
      %v1334 = vor.u32 %v1332, %v1330
      %v1336 = vshll.u32 %v1311, 16
      %v1338 = vrot.slane %v1336, 1
      %v1339 = vsel %vm473, %v1334, %v1338
      %v1340 = vshrl.u32 %v1311, 16
      %v1342 = vor.u32 %v1340, %v1338
      %v1344 = vshll.u32 %v1312, 16
      %v1346 = vrot.slane %v1344, 1
      %v1347 = vsel %vm473, %v1342, %v1346
      %v1348 = vshrl.u32 %v1312, 16
      %v1350 = vor.u32 %v1348, %v1346
      %v1352 = vshll.u32 %v1313, 16
      %v1354 = vrot.slane %v1352, 1
      %v1355 = vsel %vm473, %v1350, %v1354
      %v1356 = vshrl.u32 %v1313, 16
      %v1358 = vor.u32 %v1356, %v1354
      %v1360 = vshll.u32 %v1314, 16
      %v1362 = vrot.slane %v1360, 1
      %v1363 = vsel %vm473, %v1358, %v1362
      %v1364 = vshrl.u32 %v1314, 16
      %v1366 = vor.u32 %v1364, %v1362
      %v1368 = vshll.u32 %v1315, 16
      %v1370 = vrot.slane %v1368, 1
      %v1371 = vsel %vm473, %v1366, %v1370
      %v1372 = vshrl.u32 %v1315, 16
      %v1374 = vor.u32 %v1372, %v1370
      %v1376 = vshll.u32 %v1316, 16
      %v1378 = vrot.slane %v1376, 1
      %v1379 = vsel %vm473, %v1374, %v1378
      %v1380 = vshrl.u32 %v1316, 16
      %v1382 = vor.u32 %v1380, %v1378
      %v1384 = vshll.u32 %v1317, 16
      %v1386 = vrot.slane %v1384, 1
      %v1387 = vsel %vm473, %v1382, %v1386
      %v1388 = vshrl.u32 %v1317, 16
      %v1390 = vor.u32 %v1388, %v1386
      %v1392 = vshll.u32 %v1318, 16
      %v1394 = vrot.slane %v1392, 1
      %v1395 = vsel %vm473, %v1390, %v1394
      %v1396 = vshrl.u32 %v1318, 16
      %v1398 = vor.u32 %v1396, %v1394
      %v1400 = vshll.u32 %v1319, 16
      %v1402 = vrot.slane %v1400, 1
      %v1403 = vsel %vm473, %v1398, %v1402
      %v1404 = vshrl.u32 %v1319, 16
      %v1406 = vor.u32 %v1404, %v1402
      %v1434 = vunpack.c.l.b16 %v1249
      %v1435 = vunpack.c.l.b16 %v1250
      %v1436 = vunpack.c.l.b16 %v1251
      %v1437 = vunpack.c.l.b16 %v1252
      %v1438 = vunpack.c.l.b16 %v1253
      %v1439 = vunpack.c.l.b16 %v1254
      %v1440 = vunpack.c.l.b16 %v1255
      %v1441 = vunpack.c.l.b16 %v1256
      %v1442 = vunpack.c.l.b16 %v1257
      %v1443 = vunpack.c.l.b16 %v1258
      %v1444 = vunpack.c.l.b16 %v1259
      %v1445 = vunpack.c.l.b16 %v1260
      %v1446 = vunpack.c.l.b16 %v1261
      %v1447 = vunpack.c.l.b16 %v1262
      %v1448 = vunpack.c.l.b16 %v1263
      %v1449 = vunpack.c.l.b16 %v1264
      %v1450 = vpack.c.b16 %v1435, %v1434
      %v1451 = vpack.c.b16 %v1437, %v1436
      %v1452 = vpack.c.b16 %v1439, %v1438
      %v1453 = vpack.c.b16 %v1441, %v1440
      %v1454 = vpack.c.b16 %v1443, %v1442
      %v1455 = vpack.c.b16 %v1445, %v1444
      %v1456 = vpack.c.b16 %v1447, %v1446
      %v1457 = vpack.c.b16 %v1449, %v1448
      %1466 = vmatpush.bf16.msra.mxu0 %v1457
      %1467 = vmatpush.bf16.msra.mxu0 %v1456
      %1468 = vmatpush.bf16.msra.mxu0 %v1455
      %1469 = vmatpush.bf16.msra.mxu0 %v1454
      %1470 = vmatpush.bf16.msra.mxu0 %v1453
      %1471 = vmatpush.bf16.msra.mxu0 %v1452
      %1472 = vmatpush.bf16.msra.mxu0 %v1451
      %1473 = vmatpush.bf16.msra.mxu0 %v1450
      %1474 = vmatmul.bf16.gmra.mxu0 %v1331
      %v1475 = vpop.f32.mrf.mxu0
      %v1476 = vadd.f32 0.0, %v1475
      %v1477 = vpop.f32.mrf.mxu0
      %v1478 = vadd.f32 0.0, %v1477
      %1479 = vmatmul.bf16.gmra.mxu0 %v1339
      %v1480 = vpop.f32.mrf.mxu0
      %v1481 = vadd.f32 0.0, %v1480
      %v1482 = vpop.f32.mrf.mxu0
      %v1483 = vadd.f32 0.0, %v1482
      %1484 = vmatmul.bf16.gmra.mxu0 %v1347
      %v1485 = vpop.f32.mrf.mxu0
      %v1486 = vadd.f32 0.0, %v1485
      %v1487 = vpop.f32.mrf.mxu0
      %v1488 = vadd.f32 0.0, %v1487
      %1489 = vmatmul.bf16.gmra.mxu0 %v1355
      %v1490 = vpop.f32.mrf.mxu0
      %v1491 = vadd.f32 0.0, %v1490
      %v1492 = vpop.f32.mrf.mxu0
      %v1493 = vadd.f32 0.0, %v1492
      %1494 = vmatmul.bf16.gmra.mxu0 %v1363
      %v1495 = vpop.f32.mrf.mxu0
      %v1496 = vadd.f32 0.0, %v1495
      %v1497 = vpop.f32.mrf.mxu0
      %v1498 = vadd.f32 0.0, %v1497
      %1499 = vmatmul.bf16.gmra.mxu0 %v1371
      %v1500 = vpop.f32.mrf.mxu0
      %v1501 = vadd.f32 0.0, %v1500
      %v1502 = vpop.f32.mrf.mxu0
      %v1503 = vadd.f32 0.0, %v1502
      %1504 = vmatmul.bf16.gmra.mxu0 %v1379
      %v1505 = vpop.f32.mrf.mxu0
      %v1506 = vadd.f32 0.0, %v1505
      %v1507 = vpop.f32.mrf.mxu0
      %v1508 = vadd.f32 0.0, %v1507
      %1509 = vmatmul.bf16.gmra.mxu0 %v1387
      %v1510 = vpop.f32.mrf.mxu0
      %v1511 = vadd.f32 0.0, %v1510
      %v1512 = vpop.f32.mrf.mxu0
      %v1513 = vadd.f32 0.0, %v1512
      %1514 = vmatmul.bf16.gmra.mxu0 %v1395
      %v1515 = vpop.f32.mrf.mxu0
      %v1516 = vadd.f32 0.0, %v1515
      %v1517 = vpop.f32.mrf.mxu0
      %v1518 = vadd.f32 0.0, %v1517
      %1519 = vmatmul.bf16.gmra.mxu0 %v1403
      %v1520 = vpop.f32.mrf.mxu0
      %v1521 = vadd.f32 0.0, %v1520
      %v1522 = vpop.f32.mrf.mxu0
      %v1523 = vadd.f32 0.0, %v1522
      %1524 = vmatmul.bf16.gmra.mxu0 %v1406
      %v1525 = vpop.f32.mrf.mxu0
      %v1526 = vadd.f32 0.0, %v1525
      %v1527 = vpop.f32.mrf.mxu0
      %1528 = vdwg.mxu0
      %v1529 = vadd.f32 %v1205, %v1476
      %v1530 = vadd.f32 %v1206, %v1478
      %v1531 = vadd.f32 %v1207, %v1481
      %v1532 = vadd.f32 %v1208, %v1483
      %v1533 = vadd.f32 %v1209, %v1486
      %v1534 = vadd.f32 %v1210, %v1488
      %v1535 = vadd.f32 %v1211, %v1491
      %v1536 = vadd.f32 %v1212, %v1493
      %v1537 = vadd.f32 %v1213, %v1496
      %v1538 = vadd.f32 %v1214, %v1498
      %v1539 = vadd.f32 %v1215, %v1501
      %v1540 = vadd.f32 %v1216, %v1503
      %v1541 = vadd.f32 %v1217, %v1506
      %v1542 = vadd.f32 %v1218, %v1508
      %v1543 = vadd.f32 %v1219, %v1511
      %v1544 = vadd.f32 %v1220, %v1513
      %v1545 = vadd.f32 %v1221, %v1516
      %v1546 = vadd.f32 %v1222, %v1518
      %v1547 = vadd.f32 %v1223, %v1521
      %v1548 = vadd.f32 %v1224, %v1523
      %v1549 = vadd.f32 %v1225, %v1526
      %v1550 = vld [vmem:[#allocation2 + $0xc] sm:$0xe]
      %s1551 = scalar_lea.vmem %s2, 320
      %v1552 = vld [vmem:[%s1551] sm:$0xf]
      %v1553 = vld [vmem:[%s1551 + $0x4] sm:$0xf]
      %v1554 = vld [vmem:[%s1551 + $0x8] sm:$0xf]
      %v1555 = vld [vmem:[%s1551 + $0xc] sm:$0xf]
      %v1556 = vld [vmem:[%s1551 + $0x10] sm:$0xf]
      %v1557 = vld [vmem:[%s1551 + $0x14] sm:$0xf]
      %v1558 = vld [vmem:[%s1551 + $0x18] sm:$0xf]
      %v1559 = vld [vmem:[%s1551 + $0x1c] sm:$0xf]
      %v1560 = vld [vmem:[%s1551 + $0x20] sm:$0xf]
      %v1561 = vld [vmem:[%s1551 + $0x24] sm:$0xf]
      %v1562 = vld [vmem:[%s1551 + $0x28] sm:$0xf]
      %v1563 = vld [vmem:[%s1551 + $0x2c] sm:$0xf]
      %v1564 = vld [vmem:[%s1551 + $0x30] sm:$0xf]
      %v1565 = vld [vmem:[%s1551 + $0x34] sm:$0xf]
      %v1566 = vld [vmem:[%s1551 + $0x38] sm:$0xf]
      %v1567 = vld [vmem:[%s1551 + $0x3c] sm:$0xf]
      %v1569 = vunpack.c.l.b16 %v1550
      %v1570 = vpack.c.b16 %v1288, %v1569
      %v1571 = vrot.slane %v1570, 1
      %v1572 = vrot.slane %v1310, 1
      %v1573 = vsel %vm827, %v1571, %v1572
      %v1574 = vrot.slane %v1311, 1
      %v1575 = vsel %vm827, %v1572, %v1574
      %v1576 = vrot.slane %v1312, 1
      %v1577 = vsel %vm827, %v1574, %v1576
      %v1578 = vrot.slane %v1313, 1
      %v1579 = vsel %vm827, %v1576, %v1578
      %v1580 = vrot.slane %v1314, 1
      %v1581 = vsel %vm827, %v1578, %v1580
      %v1582 = vrot.slane %v1315, 1
      %v1583 = vsel %vm827, %v1580, %v1582
      %v1584 = vrot.slane %v1316, 1
      %v1585 = vsel %vm827, %v1582, %v1584
      %v1586 = vrot.slane %v1317, 1
      %v1587 = vsel %vm827, %v1584, %v1586
      %v1588 = vrot.slane %v1318, 1
      %v1589 = vsel %vm827, %v1586, %v1588
      %v1590 = vrot.slane %v1319, 1
      %v1591 = vsel %vm827, %v1588, %v1590
      %v1619 = vunpack.c.l.b16 %v1552
      %v1620 = vunpack.c.l.b16 %v1553
      %v1621 = vunpack.c.l.b16 %v1554
      %v1622 = vunpack.c.l.b16 %v1555
      %v1623 = vunpack.c.l.b16 %v1556
      %v1624 = vunpack.c.l.b16 %v1557
      %v1625 = vunpack.c.l.b16 %v1558
      %v1626 = vunpack.c.l.b16 %v1559
      %v1627 = vunpack.c.l.b16 %v1560
      %v1628 = vunpack.c.l.b16 %v1561
      %v1629 = vunpack.c.l.b16 %v1562
      %v1630 = vunpack.c.l.b16 %v1563
      %v1631 = vunpack.c.l.b16 %v1564
      %v1632 = vunpack.c.l.b16 %v1565
      %v1633 = vunpack.c.l.b16 %v1566
      %v1634 = vunpack.c.l.b16 %v1567
      %v1635 = vpack.c.b16 %v1620, %v1619
      %v1636 = vpack.c.b16 %v1622, %v1621
      %v1637 = vpack.c.b16 %v1624, %v1623
      %v1638 = vpack.c.b16 %v1626, %v1625
      %v1639 = vpack.c.b16 %v1628, %v1627
      %v1640 = vpack.c.b16 %v1630, %v1629
      %v1641 = vpack.c.b16 %v1632, %v1631
      %v1642 = vpack.c.b16 %v1634, %v1633
      %1651 = vmatpush.bf16.msra.mxu0 %v1642
      %1652 = vmatpush.bf16.msra.mxu0 %v1641
      %1653 = vmatpush.bf16.msra.mxu0 %v1640
      %1654 = vmatpush.bf16.msra.mxu0 %v1639
      %1655 = vmatpush.bf16.msra.mxu0 %v1638
      %1656 = vmatpush.bf16.msra.mxu0 %v1637
      %1657 = vmatpush.bf16.msra.mxu0 %v1636
      %1658 = vmatpush.bf16.msra.mxu0 %v1635
      %1659 = vmatmul.bf16.gmra.mxu0 %v1573
      %v1660 = vpop.f32.mrf.mxu0
      %v1661 = vadd.f32 0.0, %v1660
      %v1662 = vpop.f32.mrf.mxu0
      %v1663 = vadd.f32 0.0, %v1662
      %1664 = vmatmul.bf16.gmra.mxu0 %v1575
      %v1665 = vpop.f32.mrf.mxu0
      %v1666 = vadd.f32 0.0, %v1665
      %v1667 = vpop.f32.mrf.mxu0
      %v1668 = vadd.f32 0.0, %v1667
      %1669 = vmatmul.bf16.gmra.mxu0 %v1577
      %v1670 = vpop.f32.mrf.mxu0
      %v1671 = vadd.f32 0.0, %v1670
      %v1672 = vpop.f32.mrf.mxu0
      %v1673 = vadd.f32 0.0, %v1672
      %1674 = vmatmul.bf16.gmra.mxu0 %v1579
      %v1675 = vpop.f32.mrf.mxu0
      %v1676 = vadd.f32 0.0, %v1675
      %v1677 = vpop.f32.mrf.mxu0
      %v1678 = vadd.f32 0.0, %v1677
      %1679 = vmatmul.bf16.gmra.mxu0 %v1581
      %v1680 = vpop.f32.mrf.mxu0
      %v1681 = vadd.f32 0.0, %v1680
      %v1682 = vpop.f32.mrf.mxu0
      %v1683 = vadd.f32 0.0, %v1682
      %1684 = vmatmul.bf16.gmra.mxu0 %v1583
      %v1685 = vpop.f32.mrf.mxu0
      %v1686 = vadd.f32 0.0, %v1685
      %v1687 = vpop.f32.mrf.mxu0
      %v1688 = vadd.f32 0.0, %v1687
      %1689 = vmatmul.bf16.gmra.mxu0 %v1585
      %v1690 = vpop.f32.mrf.mxu0
      %v1691 = vadd.f32 0.0, %v1690
      %v1692 = vpop.f32.mrf.mxu0
      %v1693 = vadd.f32 0.0, %v1692
      %1694 = vmatmul.bf16.gmra.mxu0 %v1587
      %v1695 = vpop.f32.mrf.mxu0
      %v1696 = vadd.f32 0.0, %v1695
      %v1697 = vpop.f32.mrf.mxu0
      %v1698 = vadd.f32 0.0, %v1697
      %1699 = vmatmul.bf16.gmra.mxu0 %v1589
      %v1700 = vpop.f32.mrf.mxu0
      %v1701 = vadd.f32 0.0, %v1700
      %v1702 = vpop.f32.mrf.mxu0
      %v1703 = vadd.f32 0.0, %v1702
      %1704 = vmatmul.bf16.gmra.mxu0 %v1591
      %v1705 = vpop.f32.mrf.mxu0
      %v1706 = vadd.f32 0.0, %v1705
      %v1707 = vpop.f32.mrf.mxu0
      %v1708 = vadd.f32 0.0, %v1707
      %1709 = vmatmul.bf16.gmra.mxu0 %v1590
      %v1710 = vpop.f32.mrf.mxu0
      %v1711 = vadd.f32 0.0, %v1710
      %v1712 = vpop.f32.mrf.mxu0
      %1713 = vdwg.mxu0
      %v1714 = vadd.f32 %v1529, %v1661
      %v1715 = vadd.f32 %v1530, %v1663
      %v1716 = vadd.f32 %v1531, %v1666
      %v1717 = vadd.f32 %v1532, %v1668
      %v1718 = vadd.f32 %v1533, %v1671
      %v1719 = vadd.f32 %v1534, %v1673
      %v1720 = vadd.f32 %v1535, %v1676
      %v1721 = vadd.f32 %v1536, %v1678
      %v1722 = vadd.f32 %v1537, %v1681
      %v1723 = vadd.f32 %v1538, %v1683
      %v1724 = vadd.f32 %v1539, %v1686
      %v1725 = vadd.f32 %v1540, %v1688
      %v1726 = vadd.f32 %v1541, %v1691
      %v1727 = vadd.f32 %v1542, %v1693
      %v1728 = vadd.f32 %v1543, %v1696
      %v1729 = vadd.f32 %v1544, %v1698
      %v1730 = vadd.f32 %v1545, %v1701
      %v1731 = vadd.f32 %v1546, %v1703
      %v1732 = vadd.f32 %v1547, %v1706
      %v1733 = vadd.f32 %v1548, %v1708
      %v1734 = vadd.f32 %v1549, %v1711
      %v1735 = vld [vmem:[#allocation2 + $0x18] sm:$0xf]
      %v1736 = vld [vmem:[#allocation2 + $0x1c] sm:$0xf]
      %v1737 = vld [vmem:[#allocation2 + $0x20] sm:$0xf]
      %v1738 = vld [vmem:[#allocation2 + $0x24] sm:$0xf]
      %v1739 = vld [vmem:[#allocation2 + $0x28] sm:$0xf]
      %v1740 = vld [vmem:[#allocation2 + $0x2c] sm:$0xf]
      %v1741 = vld [vmem:[#allocation2 + $0x30] sm:$0xf]
      %v1742 = vld [vmem:[#allocation2 + $0x34] sm:$0xf]
      %v1743 = vld [vmem:[#allocation2 + $0x38] sm:$0xf]
      %v1744 = vld [vmem:[#allocation2 + $0x3c] sm:$0xf]
      %v1745 = vld [vmem:[#allocation2 + $0x40] sm:$0xf]
      %v1746 = vld [vmem:[#allocation2 + $0x44] sm:$0xf]
      %v1747 = vld [vmem:[#allocation2 + $0x48] sm:$0xf]
      %v1748 = vld [vmem:[#allocation2 + $0x4c] sm:$0xf]
      %v1749 = vld [vmem:[#allocation2 + $0x50] sm:$0xf]
      %v1750 = vld [vmem:[#allocation2 + $0x54] sm:$0xf]
      %v1751 = vld [vmem:[#allocation2 + $0x58] sm:$0xf]
      %v1752 = vld [vmem:[#allocation2 + $0x5c] sm:$0xf]
      %v1753 = vld [vmem:[#allocation2 + $0x60] sm:$0xf]
      %v1754 = vld [vmem:[#allocation2 + $0x64] sm:$0xf]
      %v1755 = vld [vmem:[#allocation2 + $0x68] sm:$0xf]
      %s1756 = scalar_lea.vmem %s2, 384
      %v1757 = vld [vmem:[%s1756] sm:$0xf]
      %v1758 = vld [vmem:[%s1756 + $0x4] sm:$0xf]
      %v1759 = vld [vmem:[%s1756 + $0x8] sm:$0xf]
      %v1760 = vld [vmem:[%s1756 + $0xc] sm:$0xf]
      %v1761 = vld [vmem:[%s1756 + $0x10] sm:$0xf]
      %v1762 = vld [vmem:[%s1756 + $0x14] sm:$0xf]
      %v1763 = vld [vmem:[%s1756 + $0x18] sm:$0xf]
      %v1764 = vld [vmem:[%s1756 + $0x1c] sm:$0xf]
      %v1765 = vld [vmem:[%s1756 + $0x20] sm:$0xf]
      %v1766 = vld [vmem:[%s1756 + $0x24] sm:$0xf]
      %v1767 = vld [vmem:[%s1756 + $0x28] sm:$0xf]
      %v1768 = vld [vmem:[%s1756 + $0x2c] sm:$0xf]
      %v1769 = vld [vmem:[%s1756 + $0x30] sm:$0xf]
      %v1770 = vld [vmem:[%s1756 + $0x34] sm:$0xf]
      %v1771 = vld [vmem:[%s1756 + $0x38] sm:$0xf]
      %v1772 = vld [vmem:[%s1756 + $0x3c] sm:$0xf]
      %v1794 = vunpack.c.l.b16 %v1735
      %v1795 = vunpack.c.l.b16 %v1736
      %v1796 = vunpack.c.l.b16 %v1737
      %v1797 = vunpack.c.l.b16 %v1738
      %v1798 = vunpack.c.l.b16 %v1739
      %v1799 = vunpack.c.l.b16 %v1740
      %v1800 = vunpack.c.l.b16 %v1741
      %v1801 = vunpack.c.l.b16 %v1742
      %v1802 = vunpack.c.l.b16 %v1743
      %v1803 = vunpack.c.l.b16 %v1744
      %v1804 = vunpack.c.l.b16 %v1745
      %v1805 = vunpack.c.l.b16 %v1746
      %v1806 = vunpack.c.l.b16 %v1747
      %v1807 = vunpack.c.l.b16 %v1748
      %v1808 = vunpack.c.l.b16 %v1749
      %v1809 = vunpack.c.l.b16 %v1750
      %v1810 = vunpack.c.l.b16 %v1751
      %v1811 = vunpack.c.l.b16 %v1752
      %v1812 = vunpack.c.l.b16 %v1753
      %v1813 = vunpack.c.l.b16 %v1754
      %v1814 = vunpack.c.l.b16 %v1755
      %v1815 = vpack.c.b16 %v1795, %v1794
      %v1816 = vpack.c.b16 %v1797, %v1796
      %v1817 = vpack.c.b16 %v1799, %v1798
      %v1818 = vpack.c.b16 %v1801, %v1800
      %v1819 = vpack.c.b16 %v1803, %v1802
      %v1820 = vpack.c.b16 %v1805, %v1804
      %v1821 = vpack.c.b16 %v1807, %v1806
      %v1822 = vpack.c.b16 %v1809, %v1808
      %v1823 = vpack.c.b16 %v1811, %v1810
      %v1824 = vpack.c.b16 %v1813, %v1812
      %v1825 = vpack.c.b16 %v1814, %v1814
      %v1853 = vunpack.c.l.b16 %v1757
      %v1854 = vunpack.c.l.b16 %v1758
      %v1855 = vunpack.c.l.b16 %v1759
      %v1856 = vunpack.c.l.b16 %v1760
      %v1857 = vunpack.c.l.b16 %v1761
      %v1858 = vunpack.c.l.b16 %v1762
      %v1859 = vunpack.c.l.b16 %v1763
      %v1860 = vunpack.c.l.b16 %v1764
      %v1861 = vunpack.c.l.b16 %v1765
      %v1862 = vunpack.c.l.b16 %v1766
      %v1863 = vunpack.c.l.b16 %v1767
      %v1864 = vunpack.c.l.b16 %v1768
      %v1865 = vunpack.c.l.b16 %v1769
      %v1866 = vunpack.c.l.b16 %v1770
      %v1867 = vunpack.c.l.b16 %v1771
      %v1868 = vunpack.c.l.b16 %v1772
      %v1869 = vpack.c.b16 %v1854, %v1853
      %v1870 = vpack.c.b16 %v1856, %v1855
      %v1871 = vpack.c.b16 %v1858, %v1857
      %v1872 = vpack.c.b16 %v1860, %v1859
      %v1873 = vpack.c.b16 %v1862, %v1861
      %v1874 = vpack.c.b16 %v1864, %v1863
      %v1875 = vpack.c.b16 %v1866, %v1865
      %v1876 = vpack.c.b16 %v1868, %v1867
      %1885 = vmatpush.bf16.msra.mxu0 %v1876
      %1886 = vmatpush.bf16.msra.mxu0 %v1875
      %1887 = vmatpush.bf16.msra.mxu0 %v1874
      %1888 = vmatpush.bf16.msra.mxu0 %v1873
      %1889 = vmatpush.bf16.msra.mxu0 %v1872
      %1890 = vmatpush.bf16.msra.mxu0 %v1871
      %1891 = vmatpush.bf16.msra.mxu0 %v1870
      %1892 = vmatpush.bf16.msra.mxu0 %v1869
      %1893 = vmatmul.bf16.gmra.mxu0 %v1815
      %v1894 = vpop.f32.mrf.mxu0
      %v1895 = vadd.f32 0.0, %v1894
      %v1896 = vpop.f32.mrf.mxu0
      %v1897 = vadd.f32 0.0, %v1896
      %1898 = vmatmul.bf16.gmra.mxu0 %v1816
      %v1899 = vpop.f32.mrf.mxu0
      %v1900 = vadd.f32 0.0, %v1899
      %v1901 = vpop.f32.mrf.mxu0
      %v1902 = vadd.f32 0.0, %v1901
      %1903 = vmatmul.bf16.gmra.mxu0 %v1817
      %v1904 = vpop.f32.mrf.mxu0
      %v1905 = vadd.f32 0.0, %v1904
      %v1906 = vpop.f32.mrf.mxu0
      %v1907 = vadd.f32 0.0, %v1906
      %1908 = vmatmul.bf16.gmra.mxu0 %v1818
      %v1909 = vpop.f32.mrf.mxu0
      %v1910 = vadd.f32 0.0, %v1909
      %v1911 = vpop.f32.mrf.mxu0
      %v1912 = vadd.f32 0.0, %v1911
      %1913 = vmatmul.bf16.gmra.mxu0 %v1819
      %v1914 = vpop.f32.mrf.mxu0
      %v1915 = vadd.f32 0.0, %v1914
      %v1916 = vpop.f32.mrf.mxu0
      %v1917 = vadd.f32 0.0, %v1916
      %1918 = vmatmul.bf16.gmra.mxu0 %v1820
      %v1919 = vpop.f32.mrf.mxu0
      %v1920 = vadd.f32 0.0, %v1919
      %v1921 = vpop.f32.mrf.mxu0
      %v1922 = vadd.f32 0.0, %v1921
      %1923 = vmatmul.bf16.gmra.mxu0 %v1821
      %v1924 = vpop.f32.mrf.mxu0
      %v1925 = vadd.f32 0.0, %v1924
      %v1926 = vpop.f32.mrf.mxu0
      %v1927 = vadd.f32 0.0, %v1926
      %1928 = vmatmul.bf16.gmra.mxu0 %v1822
      %v1929 = vpop.f32.mrf.mxu0
      %v1930 = vadd.f32 0.0, %v1929
      %v1931 = vpop.f32.mrf.mxu0
      %v1932 = vadd.f32 0.0, %v1931
      %1933 = vmatmul.bf16.gmra.mxu0 %v1823
      %v1934 = vpop.f32.mrf.mxu0
      %v1935 = vadd.f32 0.0, %v1934
      %v1936 = vpop.f32.mrf.mxu0
      %v1937 = vadd.f32 0.0, %v1936
      %1938 = vmatmul.bf16.gmra.mxu0 %v1824
      %v1939 = vpop.f32.mrf.mxu0
      %v1940 = vadd.f32 0.0, %v1939
      %v1941 = vpop.f32.mrf.mxu0
      %v1942 = vadd.f32 0.0, %v1941
      %1943 = vmatmul.bf16.gmra.mxu0 %v1825
      %v1944 = vpop.f32.mrf.mxu0
      %v1945 = vadd.f32 0.0, %v1944
      %v1946 = vpop.f32.mrf.mxu0
      %1947 = vdwg.mxu0
      %v1948 = vadd.f32 %v1714, %v1895
      %v1949 = vadd.f32 %v1715, %v1897
      %v1950 = vadd.f32 %v1716, %v1900
      %v1951 = vadd.f32 %v1717, %v1902
      %v1952 = vadd.f32 %v1718, %v1905
      %v1953 = vadd.f32 %v1719, %v1907
      %v1954 = vadd.f32 %v1720, %v1910
      %v1955 = vadd.f32 %v1721, %v1912
      %v1956 = vadd.f32 %v1722, %v1915
      %v1957 = vadd.f32 %v1723, %v1917
      %v1958 = vadd.f32 %v1724, %v1920
      %v1959 = vadd.f32 %v1725, %v1922
      %v1960 = vadd.f32 %v1726, %v1925
      %v1961 = vadd.f32 %v1727, %v1927
      %v1962 = vadd.f32 %v1728, %v1930
      %v1963 = vadd.f32 %v1729, %v1932
      %v1964 = vadd.f32 %v1730, %v1935
      %v1965 = vadd.f32 %v1731, %v1937
      %v1966 = vadd.f32 %v1732, %v1940
      %v1967 = vadd.f32 %v1733, %v1942
      %v1968 = vadd.f32 %v1734, %v1945
      %v1969 = vld [vmem:[#allocation2 + $0x18] sm:$0xf]
      %v1970 = vld [vmem:[#allocation2 + $0x1c] sm:$0xf]
      %v1971 = vld [vmem:[#allocation2 + $0x20] sm:$0xf]
      %v1972 = vld [vmem:[#allocation2 + $0x24] sm:$0xf]
      %v1973 = vld [vmem:[#allocation2 + $0x28] sm:$0xf]
      %v1974 = vld [vmem:[#allocation2 + $0x2c] sm:$0xf]
      %v1975 = vld [vmem:[#allocation2 + $0x30] sm:$0xf]
      %v1976 = vld [vmem:[#allocation2 + $0x34] sm:$0xf]
      %v1977 = vld [vmem:[#allocation2 + $0x38] sm:$0xf]
      %v1978 = vld [vmem:[#allocation2 + $0x3c] sm:$0xf]
      %v1979 = vld [vmem:[#allocation2 + $0x40] sm:$0xf]
      %v1980 = vld [vmem:[#allocation2 + $0x44] sm:$0xf]
      %v1981 = vld [vmem:[#allocation2 + $0x48] sm:$0xf]
      %v1982 = vld [vmem:[#allocation2 + $0x4c] sm:$0xf]
      %v1983 = vld [vmem:[#allocation2 + $0x50] sm:$0xf]
      %v1984 = vld [vmem:[#allocation2 + $0x54] sm:$0xf]
      %v1985 = vld [vmem:[#allocation2 + $0x58] sm:$0xf]
      %v1986 = vld [vmem:[#allocation2 + $0x5c] sm:$0xf]
      %v1987 = vld [vmem:[#allocation2 + $0x60] sm:$0xf]
      %v1988 = vld [vmem:[#allocation2 + $0x64] sm:$0xf]
      %v1989 = vld [vmem:[#allocation2 + $0x68] sm:$0xf]
      %v1990 = vld [vmem:[#allocation2 + $0x6c] sm:$0x1]
      %s1991 = scalar_lea.vmem %s2, 448
      %v1992 = vld [vmem:[%s1991] sm:$0xf]
      %v1993 = vld [vmem:[%s1991 + $0x4] sm:$0xf]
      %v1994 = vld [vmem:[%s1991 + $0x8] sm:$0xf]
      %v1995 = vld [vmem:[%s1991 + $0xc] sm:$0xf]
      %v1996 = vld [vmem:[%s1991 + $0x10] sm:$0xf]
      %v1997 = vld [vmem:[%s1991 + $0x14] sm:$0xf]
      %v1998 = vld [vmem:[%s1991 + $0x18] sm:$0xf]
      %v1999 = vld [vmem:[%s1991 + $0x1c] sm:$0xf]
      %v2000 = vld [vmem:[%s1991 + $0x20] sm:$0xf]
      %v2001 = vld [vmem:[%s1991 + $0x24] sm:$0xf]
      %v2002 = vld [vmem:[%s1991 + $0x28] sm:$0xf]
      %v2003 = vld [vmem:[%s1991 + $0x2c] sm:$0xf]
      %v2004 = vld [vmem:[%s1991 + $0x30] sm:$0xf]
      %v2005 = vld [vmem:[%s1991 + $0x34] sm:$0xf]
      %v2006 = vld [vmem:[%s1991 + $0x38] sm:$0xf]
      %v2007 = vld [vmem:[%s1991 + $0x3c] sm:$0xf]
      %v2030 = vunpack.c.l.b16 %v1969
      %v2031 = vunpack.c.l.b16 %v1970
      %v2032 = vunpack.c.l.b16 %v1971
      %v2033 = vunpack.c.l.b16 %v1972
      %v2034 = vunpack.c.l.b16 %v1973
      %v2035 = vunpack.c.l.b16 %v1974
      %v2036 = vunpack.c.l.b16 %v1975
      %v2037 = vunpack.c.l.b16 %v1976
      %v2038 = vunpack.c.l.b16 %v1977
      %v2039 = vunpack.c.l.b16 %v1978
      %v2040 = vunpack.c.l.b16 %v1979
      %v2041 = vunpack.c.l.b16 %v1980
      %v2042 = vunpack.c.l.b16 %v1981
      %v2043 = vunpack.c.l.b16 %v1982
      %v2044 = vunpack.c.l.b16 %v1983
      %v2045 = vunpack.c.l.b16 %v1984
      %v2046 = vunpack.c.l.b16 %v1985
      %v2047 = vunpack.c.l.b16 %v1986
      %v2048 = vunpack.c.l.b16 %v1987
      %v2049 = vunpack.c.l.b16 %v1988
      %v2050 = vunpack.c.l.b16 %v1989
      %v2051 = vunpack.c.l.b16 %v1990
      %v2052 = vpack.c.b16 %v2031, %v2030
      %v2053 = vpack.c.b16 %v2033, %v2032
      %v2054 = vpack.c.b16 %v2035, %v2034
      %v2055 = vpack.c.b16 %v2037, %v2036
      %v2056 = vpack.c.b16 %v2039, %v2038
      %v2057 = vpack.c.b16 %v2041, %v2040
      %v2058 = vpack.c.b16 %v2043, %v2042
      %v2059 = vpack.c.b16 %v2045, %v2044
      %v2060 = vpack.c.b16 %v2047, %v2046
      %v2061 = vpack.c.b16 %v2049, %v2048
      %v2062 = vpack.c.b16 %v2051, %v2050
      %v2064 = vshrl.u32 %v2052, 16
      %v2066 = vshll.u32 %v2052, 16
      %v2068 = vrot.slane %v2066, 1
      %v2069 = vor.u32 %v2064, %v2068
      %v2071 = vshll.u32 %v2053, 16
      %v2073 = vrot.slane %v2071, 1
      %v2074 = vsel %vm473, %v2069, %v2073
      %v2075 = vshrl.u32 %v2053, 16
      %v2077 = vor.u32 %v2075, %v2073
      %v2079 = vshll.u32 %v2054, 16
      %v2081 = vrot.slane %v2079, 1
      %v2082 = vsel %vm473, %v2077, %v2081
      %v2083 = vshrl.u32 %v2054, 16
      %v2085 = vor.u32 %v2083, %v2081
      %v2087 = vshll.u32 %v2055, 16
      %v2089 = vrot.slane %v2087, 1
      %v2090 = vsel %vm473, %v2085, %v2089
      %v2091 = vshrl.u32 %v2055, 16
      %v2093 = vor.u32 %v2091, %v2089
      %v2095 = vshll.u32 %v2056, 16
      %v2097 = vrot.slane %v2095, 1
      %v2098 = vsel %vm473, %v2093, %v2097
      %v2099 = vshrl.u32 %v2056, 16
      %v2101 = vor.u32 %v2099, %v2097
      %v2103 = vshll.u32 %v2057, 16
      %v2105 = vrot.slane %v2103, 1
      %v2106 = vsel %vm473, %v2101, %v2105
      %v2107 = vshrl.u32 %v2057, 16
      %v2109 = vor.u32 %v2107, %v2105
      %v2111 = vshll.u32 %v2058, 16
      %v2113 = vrot.slane %v2111, 1
      %v2114 = vsel %vm473, %v2109, %v2113
      %v2115 = vshrl.u32 %v2058, 16
      %v2117 = vor.u32 %v2115, %v2113
      %v2119 = vshll.u32 %v2059, 16
      %v2121 = vrot.slane %v2119, 1
      %v2122 = vsel %vm473, %v2117, %v2121
      %v2123 = vshrl.u32 %v2059, 16
      %v2125 = vor.u32 %v2123, %v2121
      %v2127 = vshll.u32 %v2060, 16
      %v2129 = vrot.slane %v2127, 1
      %v2130 = vsel %vm473, %v2125, %v2129
      %v2131 = vshrl.u32 %v2060, 16
      %v2133 = vor.u32 %v2131, %v2129
      %v2135 = vshll.u32 %v2061, 16
      %v2137 = vrot.slane %v2135, 1
      %v2138 = vsel %vm473, %v2133, %v2137
      %v2139 = vshrl.u32 %v2061, 16
      %v2141 = vor.u32 %v2139, %v2137
      %v2143 = vshll.u32 %v2062, 16
      %v2145 = vrot.slane %v2143, 1
      %v2146 = vsel %vm473, %v2141, %v2145
      %v2147 = vshrl.u32 %v2062, 16
      %v2149 = vor.u32 %v2147, %v2145
      %v2177 = vunpack.c.l.b16 %v1992
      %v2178 = vunpack.c.l.b16 %v1993
      %v2179 = vunpack.c.l.b16 %v1994
      %v2180 = vunpack.c.l.b16 %v1995
      %v2181 = vunpack.c.l.b16 %v1996
      %v2182 = vunpack.c.l.b16 %v1997
      %v2183 = vunpack.c.l.b16 %v1998
      %v2184 = vunpack.c.l.b16 %v1999
      %v2185 = vunpack.c.l.b16 %v2000
      %v2186 = vunpack.c.l.b16 %v2001
      %v2187 = vunpack.c.l.b16 %v2002
      %v2188 = vunpack.c.l.b16 %v2003
      %v2189 = vunpack.c.l.b16 %v2004
      %v2190 = vunpack.c.l.b16 %v2005
      %v2191 = vunpack.c.l.b16 %v2006
      %v2192 = vunpack.c.l.b16 %v2007
      %v2193 = vpack.c.b16 %v2178, %v2177
      %v2194 = vpack.c.b16 %v2180, %v2179
      %v2195 = vpack.c.b16 %v2182, %v2181
      %v2196 = vpack.c.b16 %v2184, %v2183
      %v2197 = vpack.c.b16 %v2186, %v2185
      %v2198 = vpack.c.b16 %v2188, %v2187
      %v2199 = vpack.c.b16 %v2190, %v2189
      %v2200 = vpack.c.b16 %v2192, %v2191
      %2209 = vmatpush.bf16.msra.mxu0 %v2200
      %2210 = vmatpush.bf16.msra.mxu0 %v2199
      %2211 = vmatpush.bf16.msra.mxu0 %v2198
      %2212 = vmatpush.bf16.msra.mxu0 %v2197
      %2213 = vmatpush.bf16.msra.mxu0 %v2196
      %2214 = vmatpush.bf16.msra.mxu0 %v2195
      %2215 = vmatpush.bf16.msra.mxu0 %v2194
      %2216 = vmatpush.bf16.msra.mxu0 %v2193
      %2217 = vmatmul.bf16.gmra.mxu0 %v2074
      %v2218 = vpop.f32.mrf.mxu0
      %v2219 = vadd.f32 0.0, %v2218
      %v2220 = vpop.f32.mrf.mxu0
      %v2221 = vadd.f32 0.0, %v2220
      %2222 = vmatmul.bf16.gmra.mxu0 %v2082
      %v2223 = vpop.f32.mrf.mxu0
      %v2224 = vadd.f32 0.0, %v2223
      %v2225 = vpop.f32.mrf.mxu0
      %v2226 = vadd.f32 0.0, %v2225
      %2227 = vmatmul.bf16.gmra.mxu0 %v2090
      %v2228 = vpop.f32.mrf.mxu0
      %v2229 = vadd.f32 0.0, %v2228
      %v2230 = vpop.f32.mrf.mxu0
      %v2231 = vadd.f32 0.0, %v2230
      %2232 = vmatmul.bf16.gmra.mxu0 %v2098
      %v2233 = vpop.f32.mrf.mxu0
      %v2234 = vadd.f32 0.0, %v2233
      %v2235 = vpop.f32.mrf.mxu0
      %v2236 = vadd.f32 0.0, %v2235
      %2237 = vmatmul.bf16.gmra.mxu0 %v2106
      %v2238 = vpop.f32.mrf.mxu0
      %v2239 = vadd.f32 0.0, %v2238
      %v2240 = vpop.f32.mrf.mxu0
      %v2241 = vadd.f32 0.0, %v2240
      %2242 = vmatmul.bf16.gmra.mxu0 %v2114
      %v2243 = vpop.f32.mrf.mxu0
      %v2244 = vadd.f32 0.0, %v2243
      %v2245 = vpop.f32.mrf.mxu0
      %v2246 = vadd.f32 0.0, %v2245
      %2247 = vmatmul.bf16.gmra.mxu0 %v2122
      %v2248 = vpop.f32.mrf.mxu0
      %v2249 = vadd.f32 0.0, %v2248
      %v2250 = vpop.f32.mrf.mxu0
      %v2251 = vadd.f32 0.0, %v2250
      %2252 = vmatmul.bf16.gmra.mxu0 %v2130
      %v2253 = vpop.f32.mrf.mxu0
      %v2254 = vadd.f32 0.0, %v2253
      %v2255 = vpop.f32.mrf.mxu0
      %v2256 = vadd.f32 0.0, %v2255
      %2257 = vmatmul.bf16.gmra.mxu0 %v2138
      %v2258 = vpop.f32.mrf.mxu0
      %v2259 = vadd.f32 0.0, %v2258
      %v2260 = vpop.f32.mrf.mxu0
      %v2261 = vadd.f32 0.0, %v2260
      %2262 = vmatmul.bf16.gmra.mxu0 %v2146
      %v2263 = vpop.f32.mrf.mxu0
      %v2264 = vadd.f32 0.0, %v2263
      %v2265 = vpop.f32.mrf.mxu0
      %v2266 = vadd.f32 0.0, %v2265
      %2267 = vmatmul.bf16.gmra.mxu0 %v2149
      %v2268 = vpop.f32.mrf.mxu0
      %v2269 = vadd.f32 0.0, %v2268
      %v2270 = vpop.f32.mrf.mxu0
      %2271 = vdwg.mxu0
      %v2272 = vadd.f32 %v1948, %v2219
      %v2273 = vadd.f32 %v1949, %v2221
      %v2274 = vadd.f32 %v1950, %v2224
      %v2275 = vadd.f32 %v1951, %v2226
      %v2276 = vadd.f32 %v1952, %v2229
      %v2277 = vadd.f32 %v1953, %v2231
      %v2278 = vadd.f32 %v1954, %v2234
      %v2279 = vadd.f32 %v1955, %v2236
      %v2280 = vadd.f32 %v1956, %v2239
      %v2281 = vadd.f32 %v1957, %v2241
      %v2282 = vadd.f32 %v1958, %v2244
      %v2283 = vadd.f32 %v1959, %v2246
      %v2284 = vadd.f32 %v1960, %v2249
      %v2285 = vadd.f32 %v1961, %v2251
      %v2286 = vadd.f32 %v1962, %v2254
      %v2287 = vadd.f32 %v1963, %v2256
      %v2288 = vadd.f32 %v1964, %v2259
      %v2289 = vadd.f32 %v1965, %v2261
      %v2290 = vadd.f32 %v1966, %v2264
      %v2291 = vadd.f32 %v1967, %v2266
      %v2292 = vadd.f32 %v1968, %v2269
      %v2293 = vld [vmem:[#allocation2 + $0x18] sm:$0xe]
      %s2294 = scalar_lea.vmem %s2, 512
      %v2295 = vld [vmem:[%s2294] sm:$0xf]
      %v2296 = vld [vmem:[%s2294 + $0x4] sm:$0xf]
      %v2297 = vld [vmem:[%s2294 + $0x8] sm:$0xf]
      %v2298 = vld [vmem:[%s2294 + $0xc] sm:$0xf]
      %v2299 = vld [vmem:[%s2294 + $0x10] sm:$0xf]
      %v2300 = vld [vmem:[%s2294 + $0x14] sm:$0xf]
      %v2301 = vld [vmem:[%s2294 + $0x18] sm:$0xf]
      %v2302 = vld [vmem:[%s2294 + $0x1c] sm:$0xf]
      %v2303 = vld [vmem:[%s2294 + $0x20] sm:$0xf]
      %v2304 = vld [vmem:[%s2294 + $0x24] sm:$0xf]
      %v2305 = vld [vmem:[%s2294 + $0x28] sm:$0xf]
      %v2306 = vld [vmem:[%s2294 + $0x2c] sm:$0xf]
      %v2307 = vld [vmem:[%s2294 + $0x30] sm:$0xf]
      %v2308 = vld [vmem:[%s2294 + $0x34] sm:$0xf]
      %v2309 = vld [vmem:[%s2294 + $0x38] sm:$0xf]
      %v2310 = vld [vmem:[%s2294 + $0x3c] sm:$0xf]
      %v2312 = vunpack.c.l.b16 %v2293
      %v2313 = vpack.c.b16 %v2031, %v2312
      %v2314 = vrot.slane %v2313, 1
      %v2315 = vrot.slane %v2053, 1
      %v2316 = vsel %vm827, %v2314, %v2315
      %v2317 = vrot.slane %v2054, 1
      %v2318 = vsel %vm827, %v2315, %v2317
      %v2319 = vrot.slane %v2055, 1
      %v2320 = vsel %vm827, %v2317, %v2319
      %v2321 = vrot.slane %v2056, 1
      %v2322 = vsel %vm827, %v2319, %v2321
      %v2323 = vrot.slane %v2057, 1
      %v2324 = vsel %vm827, %v2321, %v2323
      %v2325 = vrot.slane %v2058, 1
      %v2326 = vsel %vm827, %v2323, %v2325
      %v2327 = vrot.slane %v2059, 1
      %v2328 = vsel %vm827, %v2325, %v2327
      %v2329 = vrot.slane %v2060, 1
      %v2330 = vsel %vm827, %v2327, %v2329
      %v2331 = vrot.slane %v2061, 1
      %v2332 = vsel %vm827, %v2329, %v2331
      %v2333 = vrot.slane %v2062, 1
      %v2334 = vsel %vm827, %v2331, %v2333
      %v2362 = vunpack.c.l.b16 %v2295
      %v2363 = vunpack.c.l.b16 %v2296
      %v2364 = vunpack.c.l.b16 %v2297
      %v2365 = vunpack.c.l.b16 %v2298
      %v2366 = vunpack.c.l.b16 %v2299
      %v2367 = vunpack.c.l.b16 %v2300
      %v2368 = vunpack.c.l.b16 %v2301
      %v2369 = vunpack.c.l.b16 %v2302
      %v2370 = vunpack.c.l.b16 %v2303
      %v2371 = vunpack.c.l.b16 %v2304
      %v2372 = vunpack.c.l.b16 %v2305
      %v2373 = vunpack.c.l.b16 %v2306
      %v2374 = vunpack.c.l.b16 %v2307
      %v2375 = vunpack.c.l.b16 %v2308
      %v2376 = vunpack.c.l.b16 %v2309
      %v2377 = vunpack.c.l.b16 %v2310
      %v2378 = vpack.c.b16 %v2363, %v2362
      %v2379 = vpack.c.b16 %v2365, %v2364
      %v2380 = vpack.c.b16 %v2367, %v2366
      %v2381 = vpack.c.b16 %v2369, %v2368
      %v2382 = vpack.c.b16 %v2371, %v2370
      %v2383 = vpack.c.b16 %v2373, %v2372
      %v2384 = vpack.c.b16 %v2375, %v2374
      %v2385 = vpack.c.b16 %v2377, %v2376
      %2394 = vmatpush.bf16.msra.mxu0 %v2385
      %2395 = vmatpush.bf16.msra.mxu0 %v2384
      %2396 = vmatpush.bf16.msra.mxu0 %v2383
      %2397 = vmatpush.bf16.msra.mxu0 %v2382
      %2398 = vmatpush.bf16.msra.mxu0 %v2381
      %2399 = vmatpush.bf16.msra.mxu0 %v2380
      %2400 = vmatpush.bf16.msra.mxu0 %v2379
      %2401 = vmatpush.bf16.msra.mxu0 %v2378
      %2402 = vmatmul.bf16.gmra.mxu0 %v2316
      %v2403 = vpop.f32.mrf.mxu0
      %v2404 = vadd.f32 0.0, %v2403
      %v2405 = vpop.f32.mrf.mxu0
      %v2406 = vadd.f32 0.0, %v2405
      %2407 = vmatmul.bf16.gmra.mxu0 %v2318
      %v2408 = vpop.f32.mrf.mxu0
      %v2409 = vadd.f32 0.0, %v2408
      %v2410 = vpop.f32.mrf.mxu0
      %v2411 = vadd.f32 0.0, %v2410
      %2412 = vmatmul.bf16.gmra.mxu0 %v2320
      %v2413 = vpop.f32.mrf.mxu0
      %v2414 = vadd.f32 0.0, %v2413
      %v2415 = vpop.f32.mrf.mxu0
      %v2416 = vadd.f32 0.0, %v2415
      %2417 = vmatmul.bf16.gmra.mxu0 %v2322
      %v2418 = vpop.f32.mrf.mxu0
      %v2419 = vadd.f32 0.0, %v2418
      %v2420 = vpop.f32.mrf.mxu0
      %v2421 = vadd.f32 0.0, %v2420
      %2422 = vmatmul.bf16.gmra.mxu0 %v2324
      %v2423 = vpop.f32.mrf.mxu0
      %v2424 = vadd.f32 0.0, %v2423
      %v2425 = vpop.f32.mrf.mxu0
      %v2426 = vadd.f32 0.0, %v2425
      %2427 = vmatmul.bf16.gmra.mxu0 %v2326
      %v2428 = vpop.f32.mrf.mxu0
      %v2429 = vadd.f32 0.0, %v2428
      %v2430 = vpop.f32.mrf.mxu0
      %v2431 = vadd.f32 0.0, %v2430
      %2432 = vmatmul.bf16.gmra.mxu0 %v2328
      %v2433 = vpop.f32.mrf.mxu0
      %v2434 = vadd.f32 0.0, %v2433
      %v2435 = vpop.f32.mrf.mxu0
      %v2436 = vadd.f32 0.0, %v2435
      %2437 = vmatmul.bf16.gmra.mxu0 %v2330
      %v2438 = vpop.f32.mrf.mxu0
      %v2439 = vadd.f32 0.0, %v2438
      %v2440 = vpop.f32.mrf.mxu0
      %v2441 = vadd.f32 0.0, %v2440
      %2442 = vmatmul.bf16.gmra.mxu0 %v2332
      %v2443 = vpop.f32.mrf.mxu0
      %v2444 = vadd.f32 0.0, %v2443
      %v2445 = vpop.f32.mrf.mxu0
      %v2446 = vadd.f32 0.0, %v2445
      %2447 = vmatmul.bf16.gmra.mxu0 %v2334
      %v2448 = vpop.f32.mrf.mxu0
      %v2449 = vadd.f32 0.0, %v2448
      %v2450 = vpop.f32.mrf.mxu0
      %v2451 = vadd.f32 0.0, %v2450
      %2452 = vmatmul.bf16.gmra.mxu0 %v2333
      %v2453 = vpop.f32.mrf.mxu0
      %v2454 = vadd.f32 0.0, %v2453
      %v2455 = vpop.f32.mrf.mxu0
      %2456 = vdwg.mxu0
      %v2457 = vadd.f32 %v2272, %v2404
      %v2458 = vadd.f32 %v2273, %v2406
      %v2459 = vadd.f32 %v2274, %v2409
      %v2460 = vadd.f32 %v2275, %v2411
      %v2461 = vadd.f32 %v2276, %v2414
      %v2462 = vadd.f32 %v2277, %v2416
      %v2463 = vadd.f32 %v2278, %v2419
      %v2464 = vadd.f32 %v2279, %v2421
      %v2465 = vadd.f32 %v2280, %v2424
      %v2466 = vadd.f32 %v2281, %v2426
      %v2467 = vadd.f32 %v2282, %v2429
      %v2468 = vadd.f32 %v2283, %v2431
      %v2469 = vadd.f32 %v2284, %v2434
      %v2470 = vadd.f32 %v2285, %v2436
      %v2471 = vadd.f32 %v2286, %v2439
      %v2472 = vadd.f32 %v2287, %v2441
      %v2473 = vadd.f32 %v2288, %v2444
      %v2474 = vadd.f32 %v2289, %v2446
      %v2475 = vadd.f32 %v2290, %v2449
      %v2476 = vadd.f32 %v2291, %v2451
      %v2477 = vadd.f32 %v2292, %v2454
      %v2478 = vld [vmem:[%s3] sm:$0x1]
      %v2480 = vperm.slane %v2478, 0
      %v2482 = vadd.f32 %v2457, %v2480
      %v2483 = vadd.f32 %v2458, %v2480
      %v2484 = vadd.f32 %v2459, %v2480
      %v2485 = vadd.f32 %v2460, %v2480
      %v2486 = vadd.f32 %v2461, %v2480
      %v2487 = vadd.f32 %v2462, %v2480
      %v2488 = vadd.f32 %v2463, %v2480
      %v2489 = vadd.f32 %v2464, %v2480
      %v2490 = vadd.f32 %v2465, %v2480
      %v2491 = vadd.f32 %v2466, %v2480
      %v2492 = vadd.f32 %v2467, %v2480
      %v2493 = vadd.f32 %v2468, %v2480
      %v2494 = vadd.f32 %v2469, %v2480
      %v2495 = vadd.f32 %v2470, %v2480
      %v2496 = vadd.f32 %v2471, %v2480
      %v2497 = vadd.f32 %v2472, %v2480
      %v2498 = vadd.f32 %v2473, %v2480
      %v2499 = vadd.f32 %v2474, %v2480
      %v2500 = vadd.f32 %v2475, %v2480
      %v2501 = vadd.f32 %v2476, %v2480
      %v2502 = vadd.f32 %v2477, %v2480
      %v2503 = vmax.f32 %v2482, 0.0
      %v2504 = vmax.f32 %v2483, 0.0
      %v2505 = vmax.f32 %v2484, 0.0
      %v2506 = vmax.f32 %v2485, 0.0
      %v2507 = vmax.f32 %v2486, 0.0
      %v2508 = vmax.f32 %v2487, 0.0
      %v2509 = vmax.f32 %v2488, 0.0
      %v2510 = vmax.f32 %v2489, 0.0
      %v2511 = vmax.f32 %v2490, 0.0
      %v2512 = vmax.f32 %v2491, 0.0
      %v2513 = vmax.f32 %v2492, 0.0
      %v2514 = vmax.f32 %v2493, 0.0
      %v2515 = vmax.f32 %v2494, 0.0
      %v2516 = vmax.f32 %v2495, 0.0
      %v2517 = vmax.f32 %v2496, 0.0
      %v2518 = vmax.f32 %v2497, 0.0
      %v2519 = vmax.f32 %v2498, 0.0
      %v2520 = vmax.f32 %v2499, 0.0
      %v2521 = vmax.f32 %v2500, 0.0
      %v2522 = vmax.f32 %v2501, 0.0
      %v2523 = vmax.f32 %v2502, 0.0
      %v2524 = vpack.c.bf16 %v2503, %v2503
      %v2525 = vpack.c.bf16 %v2504, %v2504
      %v2526 = vpack.c.bf16 %v2505, %v2505
      %v2527 = vpack.c.bf16 %v2506, %v2506
      %v2528 = vpack.c.bf16 %v2507, %v2507
      %v2529 = vpack.c.bf16 %v2508, %v2508
      %v2530 = vpack.c.bf16 %v2509, %v2509
      %v2531 = vpack.c.bf16 %v2510, %v2510
      %v2532 = vpack.c.bf16 %v2511, %v2511
      %v2533 = vpack.c.bf16 %v2512, %v2512
      %v2534 = vpack.c.bf16 %v2513, %v2513
      %v2535 = vpack.c.bf16 %v2514, %v2514
      %v2536 = vpack.c.bf16 %v2515, %v2515
      %v2537 = vpack.c.bf16 %v2516, %v2516
      %v2538 = vpack.c.bf16 %v2517, %v2517
      %v2539 = vpack.c.bf16 %v2518, %v2518
      %v2540 = vpack.c.bf16 %v2519, %v2519
      %v2541 = vpack.c.bf16 %v2520, %v2520
      %v2542 = vpack.c.bf16 %v2521, %v2521
      %v2543 = vpack.c.bf16 %v2522, %v2522
      %v2544 = vpack.c.bf16 %v2523, %v2523
      %vm2545 = vcmask 60416
      %2546 = vst.msk [vmem:[%s305] sm:$0xf] %vm2545, %v2524
      %2547 = vst.msk [vmem:[%s305 + $0x4] sm:$0xf] %vm2545, %v2525
      %2548 = vst.msk [vmem:[%s305 + $0x8] sm:$0xf] %vm2545, %v2526
      %2549 = vst.msk [vmem:[%s305 + $0xc] sm:$0xf] %vm2545, %v2527
      %2550 = vst.msk [vmem:[%s305 + $0x10] sm:$0xf] %vm2545, %v2528
      %2551 = vst.msk [vmem:[%s305 + $0x14] sm:$0xf] %vm2545, %v2529
      %2552 = vst.msk [vmem:[%s305 + $0x18] sm:$0xf] %vm2545, %v2530
      %2553 = vst.msk [vmem:[%s305 + $0x1c] sm:$0xf] %vm2545, %v2531
      %2554 = vst.msk [vmem:[%s305 + $0x20] sm:$0xf] %vm2545, %v2532
      %2555 = vst.msk [vmem:[%s305 + $0x24] sm:$0xf] %vm2545, %v2533
      %2556 = vst.msk [vmem:[%s305 + $0x28] sm:$0xf] %vm2545, %v2534
      %2557 = vst.msk [vmem:[%s305 + $0x2c] sm:$0xf] %vm2545, %v2535
      %2558 = vst.msk [vmem:[%s305 + $0x30] sm:$0xf] %vm2545, %v2536
      %2559 = vst.msk [vmem:[%s305 + $0x34] sm:$0xf] %vm2545, %v2537
      %2560 = vst.msk [vmem:[%s305 + $0x38] sm:$0xf] %vm2545, %v2538
      %2561 = vst.msk [vmem:[%s305 + $0x3c] sm:$0xf] %vm2545, %v2539
      %2562 = vst.msk [vmem:[%s305 + $0x40] sm:$0xf] %vm2545, %v2540
      %2563 = vst.msk [vmem:[%s305 + $0x44] sm:$0xf] %vm2545, %v2541
      %2564 = vst.msk [vmem:[%s305 + $0x48] sm:$0xf] %vm2545, %v2542
      %2565 = vst.msk [vmem:[%s305 + $0x4c] sm:$0xf] %vm2545, %v2543
      %2566 = vst.msk [vmem:[%s305 + $0x50] sm:$0xf] %vm2545, %v2544
      %s2567 = smul.u32 21, %s20
      %p2568 = scmp.lt.s32.totalorder %s19, 1
      %s2569 = scalar_select %p2568, %s19, 1
      %p2570 = scmp.lt.s32.totalorder %s2567, 62
      %s2571 = scalar_select %p2570, %s2567, 62
      %s2572 = smul.addr %s2569, 63
      %s2573 = sadd.s32 %s2571, %s2572
      %s2574 = smul.addr %s2573, 4
      %s2575 = scalar_lea.vmem %s4, %s2574
      // Predicated region
      $region37: #{basic_conv2d.1} parent=35 // pred_check
        %p2576 = pneg %p149
      $region38: #{basic_conv2d.1} parent=35 // pred_check_branch
        %2578 = sbr.rel (%p2576) target = $region40
      $region39: #{basic_conv2d.1} parent=35 // pred_region
        %s2579 = smul.u32 21, %s20
      $region40: #{basic_conv2d.1} parent=35 // pred_fallthru
        _
    $region36: #{basic_conv2d.1} parent=5 // pred_fallthru
      _
    %p2580 = scmp.le.s32.totalorder 2, %s10
    // Predicated region
    $region41: #{basic_conv2d.1} parent=5 // pred_check
      %p2581 = pneg %p2580
    $region42: #{basic_conv2d.1} parent=5 // pred_check_branch
      %2583 = sbr.rel (%p2581) target = $region44
    $region43: #{basic_conv2d.1} parent=5 // pred_region
      %s2584 = ssub.s32 %s10, 2
      // Predicated region
      $region45: #{basic_conv2d.1} parent=43 // pred_check
        %p2585 = pneg %p155
      $region46: #{basic_conv2d.1} parent=43 // pred_check_branch
        %2587 = sbr.rel (%p2585) target = $region48
      $region47: #{basic_conv2d.1} parent=43 // pred_region
        %s2588 = smul.u32 21, %s22
        %p2589 = scmp.lt.s32.totalorder %s21, 1
        %s2590 = scalar_select %p2589, %s21, 1
        %p2591 = scmp.lt.s32.totalorder %s2588, 62
        %s2592 = scalar_select %p2591, %s2588, 62
        %s2593 = smul.addr %s2590, 63
        %s2594 = sadd.s32 %s2592, %s2593
        %s2595 = smul.addr %s2594, 4
        %s2596 = scalar_lea.vmem %s4, %s2595
      $region48: #{basic_conv2d.1} parent=43 // pred_fallthru
        _
    $region44: #{basic_conv2d.1} parent=5 // pred_fallthru
      _
  $region6: #{basic_conv2d.1} parent=0 // loop_footer
    %s14 = sadd.s32 1, %s10
  $region7: #{basic_conv2d.1} parent=0 // loop_footer_branch
    %9 = sbr.rel target = $region3
  $region8: #{basic_conv2d.1} parent=0 // loop_exit
    _

</llo_original>
